<compile_context>
chip_gen: v7x
topology: tpu7x:2x2x1
jax: 0.10.0
libtpu: 0.0.40
codegen_flags: <defaults>
</compile_context>

<pallas_src>
import numpy as np
import jax
import jax.numpy as jnp
from jax import lax
from jax.experimental import pallas as pl
from jax.experimental.pallas import tpu as pltpu


TILE_B_MAX = 256   # multiple of 8; big enough to fill the MXU M rows on v5e/v6e/v7x


def _round_up(n, m):
    return ((n + m - 1) // m) * m


# ----------------------------- Pallas kernel -------------------------------

def fused_cnn_kernel(x_ref, wconv_ref, bpool_ref, w1_ref, b1_ref, w2_ref, b2_ref, o_ref):
    """One TILE_B batch tile of the whole CNN forward.

    x:     [TILE_B, 128]  flattened 10x10 input, zero-padded 100 -> 128 lanes
    wconv: [4, 128, 512]  conv-as-matmul matrix, one [128,512] slab per 2x2 pool
                          tap (tap = dh*2+dw); output lane order c*16 + ph*4 + pw
                          (== PyTorch CHW flatten order of the pooled map)
    bpool: [1, 512]       conv bias broadcast in pooled / CHW lane order (f32)
    w1:    [512, 128]     fc1 weight, cols zero-padded 64 -> 128
    b1:    [1, 128]       fc1 bias, zero-padded (f32)
    w2:    [128, 128]     fc2 weight, rows zero-padded 64 -> 128, cols 2 -> 128
    b2:    [1, 128]       fc2 bias, zero-padded (f32)
    o:     [TILE_B, 128]  lane-dense output; real logits live in lanes [0, 2)
    """
    x = x_ref[...]

    # Conv + 2x2/stride-2 max-pool as a running max over four per-tap MXU matmuls.
    # relu(max(.) + b) == max(relu(. + b)), so bias + ReLU are applied after the
    # max on 512 lanes; peak live intermediate is [TILE_B, 512], not 2048.
    pooled = jnp.dot(x, wconv_ref[0], preferred_element_type=jnp.float32)
    for t in range(1, 4):
        pooled = jnp.maximum(
            pooled, jnp.dot(x, wconv_ref[t], preferred_element_type=jnp.float32))
    act = jnp.maximum(pooled + bpool_ref[...], 0.0)            # [TILE_B, 512], f32

    # fc1 + ReLU (MXU, f32 accumulation).
    h = jnp.maximum(
        jnp.dot(act.astype(w1_ref.dtype), w1_ref[...],
                preferred_element_type=jnp.float32) + b1_ref[...], 0.0)

    # fc2 -> lane-dense 128-wide store (unmasked full-width vst).
    o_ref[...] = (jnp.dot(h.astype(w2_ref.dtype), w2_ref[...],
                          preferred_element_type=jnp.float32) + b2_ref[...]
                  ).astype(o_ref.dtype)


# --------------------------- one-time weight prep ---------------------------

def _build_conv_tap_matrices(w_conv_hwio):
    """[3,3,1,32] HWIO conv weights -> [4, 128, 512] per-pool-tap matrices.

    (x.reshape(B,100) zero-padded to [B,128]) @ taps[dh*2+dw] gives, at lane
    c*16 + ph*4 + pw, the valid 3x3 conv output at (channel c, row 2*ph+dh,
    col 2*pw+dw).  The max over the 4 taps is exactly the 2x2 stride-2 max-pool
    and the lane order matches PyTorch's CHW flatten of the pooled [32,4,4] map."""
    sel = np.zeros((3, 2, 4, 10), np.float32)      # [k, d, p, i]: 1 iff i == 2p + d + k
    for k in range(3):
        for d in range(2):
            for p in range(4):
                sel[k, d, p, 2 * p + d + k] = 1.0
    sel = jnp.asarray(sel)
    w = w_conv_hwio[:, :, 0, :].astype(jnp.float32)              # [3,3,32] (kh,kw,c)
    # full[h_in, w_in, dh, dw, c, ph, pw]
    full = jnp.einsum('adph,beqw,abc->hwdecpq', sel, sel, w)
    mat = full.reshape(100, 4, 512)                              # rows: (h_in, w_in)
    mat = jnp.pad(mat, ((0, 28), (0, 0), (0, 0)))                # K: 100 -> 128
    return jnp.transpose(mat, (1, 0, 2))                         # [4, 128, 512]


def prepare_cnn_params(params, compute_dtype=jnp.float32):
    """One-time parameter prep (hoisted off the per-example hot path).

    NOTE: fc1/fc2 use the x @ W (in, out) convention; real PyTorch nn.Linear
    weights ([out, in]) must be transposed before being passed in here.
    """
    w_conv, b_conv, w1, b1, w2, b2 = params
    wconv_taps = _build_conv_tap_matrices(w_conv).astype(compute_dtype)   # [4,128,512]
    b_pool = jnp.repeat(b_conv, 16).reshape(1, 512).astype(jnp.float32)   # c*16+ph*4+pw
    w1_p = jnp.pad(w1, ((0, 0), (0, 64))).astype(compute_dtype)           # [512,128]
    b1_p = jnp.pad(b1, (0, 64)).reshape(1, 128).astype(jnp.float32)
    w2_p = jnp.pad(w2, ((0, 64), (0, 126))).astype(compute_dtype)         # [128,128]
    b2_p = jnp.pad(b2, (0, 126)).reshape(1, 128).astype(jnp.float32)
    return (wconv_taps, b_pool, w1_p, b1_p, w2_p, b2_p)


# ------------------------------ forward wrapper -----------------------------

def cnn_forward_prepared(x_nchw, prepped):
    wconv_taps, b_pool, w1_p, b1_p, w2_p, b2_p = prepped
    compute_dtype = wconv_taps.dtype
    B = x_nchw.shape[0]

    # Batch tiling: TILE_B rows per grid step.  Per-tile VMEM (double-buffered x
    # and out tiles + resident weights + [TILE_B,512] intermediates) stays a few
    # MiB at TILE_B=256, so no vmem_limit_bytes override is needed on any chip.
    tile_b = min(TILE_B_MAX, _round_up(B, 8))
    b_pad = _round_up(B, tile_b)
    grid = (b_pad // tile_b,)

    # C_in == 1 so NCHW -> flat is a pure reshape; pad rows B -> b_pad and
    # lanes 100 -> 128 (lane alignment), then cast to the MXU operand dtype.
    x_flat = jnp.pad(x_nchw.reshape(B, 100),
                     ((0, b_pad - B), (0, 28))).astype(compute_dtype)

    itemsize = jnp.dtype(compute_dtype).itemsize
    cost = pl.CostEstimate(
        flops=2 * b_pad * (128 * 2048 + 512 * 128 + 128 * 128),
        transcendentals=0,
        bytes_accessed=(b_pad * 128 * itemsize                       # x
                        + b_pad * 128 * 4                            # out
                        + (4 * 128 * 512 + 512 * 128 + 128 * 128) * itemsize
                        + (512 + 128 + 128) * 4))                    # biases

    const2 = lambda i: (0, 0)
    out = pl.pallas_call(
        fused_cnn_kernel,
        out_shape=jax.ShapeDtypeStruct((b_pad, 128), jnp.float32),
        grid=grid,
        in_specs=[
            pl.BlockSpec((tile_b, 128), lambda i: (i, 0)),           # x: tiled over B
            pl.BlockSpec((4, 128, 512), lambda i: (0, 0, 0)),        # weights: resident
            pl.BlockSpec((1, 512), const2),
            pl.BlockSpec((512, 128), const2),
            pl.BlockSpec((1, 128), const2),
            pl.BlockSpec((128, 128), const2),
            pl.BlockSpec((1, 128), const2),
        ],
        out_specs=pl.BlockSpec((tile_b, 128), lambda i: (i, 0)),     # lane-dense out
        compiler_params=pltpu.CompilerParams(
            dimension_semantics=("parallel",)),   # shard batch tiles across v7x's 2 TCs
        cost_estimate=cost,
    )(x_flat, wconv_taps, b_pool, w1_p, b1_p, w2_p, b2_p)

    return out[:B, :2]


def cnn_forward(x_nchw, params, compute_dtype=jnp.float32):
    return cnn_forward_prepared(x_nchw, prepare_cnn_params(params, compute_dtype))


# --------------------------- pure-JAX reference ----------------------------

def cnn_reference(x_nchw, params):
    w_conv, b_conv, w1, b1, w2, b2 = params
    B = x_nchw.shape[0]
    w_oihw = jnp.transpose(w_conv, (3, 2, 0, 1))                  # HWIO -> OIHW
    c = lax.conv_general_dilated(
        x_nchw, w_oihw, window_strides=(1, 1), padding="VALID",
        dimension_numbers=("NCHW", "OIHW", "NCHW"))
    r = jnp.maximum(c + b_conv.reshape(1, 32, 1, 1), 0.0)
    p = lax.reduce_window(r, -jnp.inf, lax.max,
                          window_dimensions=(1, 1, 2, 2),
                          window_strides=(1, 1, 2, 2), padding="VALID")
    flat = p.reshape(B, 32 * 4 * 4)
    h = jnp.maximum(flat @ w1 + b1, 0.0)
    return h @ w2 + b2


# --------------------------------- main ------------------------------------

if __name__ == "__main__":
    key = jax.random.PRNGKey(0)
    k_x, k_wc, k_bc, k_w1, k_b1, k_w2, k_b2 = jax.random.split(key, 7)

    B = 2
    # Input [B,1,10,10]: conv(3x3, valid) -> 8x8, pool(2) -> 4x4 -> 32*4*4 = 512
    x = jax.random.normal(k_x, (B, 1, 10, 10), jnp.float32)

    # Deterministic synthetic parameters (shapes from the module __init__).
    w_conv = jax.random.normal(k_wc, (3, 3, 1, 32), jnp.float32) * 0.1   # HWIO
    b_conv = jax.random.normal(k_bc, (32,), jnp.float32) * 0.1
    w1 = jax.random.normal(k_w1, (512, 64), jnp.float32) * 0.05          # x @ W convention
    b1 = jax.random.normal(k_b1, (64,), jnp.float32) * 0.05
    w2 = jax.random.normal(k_w2, (64, 2), jnp.float32) * 0.05
    b2 = jax.random.normal(k_b2, (2,), jnp.float32) * 0.05
    params = (w_conv, b_conv, w1, b1, w2, b2)

    ref = jax.block_until_ready(cnn_reference(x, params))
    fwd = jax.jit(cnn_forward_prepared)

    # f32 MXU operands: exact path, tight tolerance.
    prepped_f32 = prepare_cnn_params(params, jnp.float32)
    out_f32 = jax.block_until_ready(fwd(x, prepped_f32))
    assert out_f32.shape == (B, 2), out_f32.shape
    if not jnp.allclose(out_f32, ref, atol=1e-4, rtol=1e-4):
        raise AssertionError("Pallas CNN (f32) output mismatch vs JAX reference")

    # bf16 MXU operands (native on v6e/v7x), f32 accumulation: looser tolerance
    # vs the f32 reference, per the review's correctness note.
    prepped_bf16 = prepare_cnn_params(params, jnp.bfloat16)
    out_bf16 = jax.block_until_ready(fwd(x, prepped_bf16))
    if not jnp.allclose(out_bf16, ref, atol=3e-2, rtol=3e-2):
        raise AssertionError("Pallas CNN (bf16) output mismatch vs JAX reference")

    print("KERNEL_OK")
</pallas_src>

<mosaic_0001>
module attributes {stable_mosaic.version = 11 : i64} {
  func.func @fused_cnn_kernel(%arg0: i32, %arg1: memref<8x128xf32, #tpu.memory_space<vmem>>, %arg2: memref<4x128x512xf32, #tpu.memory_space<vmem>>, %arg3: memref<1x512xf32, #tpu.memory_space<vmem>>, %arg4: memref<512x128xf32, #tpu.memory_space<vmem>>, %arg5: memref<1x128xf32, #tpu.memory_space<vmem>>, %arg6: memref<128x128xf32, #tpu.memory_space<vmem>>, %arg7: memref<1x128xf32, #tpu.memory_space<vmem>>, %arg8: memref<8x128xf32, #tpu.memory_space<vmem>>) attributes {dimension_semantics = [#tpu.dimension_semantics<parallel>], iteration_bounds = array<i64: 1>, scalar_prefetch = 0 : i64, scratch_operands = 0 : i64, tpu.core_type = #tpu.core_type<tc>, window_params = [{transform_indices = @transform_0, window_bounds = array<i64: 8, 128>}, {pipeline_mode = #tpu.pipeline_mode<synchronous>, transform_indices = @transform_1, window_bounds = array<i64: 4, 128, 512>}, {pipeline_mode = #tpu.pipeline_mode<synchronous>, transform_indices = @transform_2, window_bounds = array<i64: 1, 512>}, {pipeline_mode = #tpu.pipeline_mode<synchronous>, transform_indices = @transform_3, window_bounds = array<i64: 512, 128>}, {pipeline_mode = #tpu.pipeline_mode<synchronous>, transform_indices = @transform_4, window_bounds = array<i64: 1, 128>}, {pipeline_mode = #tpu.pipeline_mode<synchronous>, transform_indices = @transform_5, window_bounds = array<i64: 128, 128>}, {pipeline_mode = #tpu.pipeline_mode<synchronous>, transform_indices = @transform_6, window_bounds = array<i64: 1, 128>}, {transform_indices = @transform_7, window_bounds = array<i64: 8, 128>}]} {
    %c0 = arith.constant 0 : index
    %c0_0 = arith.constant 0 : index
    %0 = vector.load %arg1[%c0, %c0_0] : memref<8x128xf32, #tpu.memory_space<vmem>>, vector<8x128xf32>
    %c0_1 = arith.constant 0 : index
    %c0_2 = arith.constant 0 : index
    %c0_3 = arith.constant 0 : index
    %1 = vector.load %arg2[%c0_1, %c0_2, %c0_3] : memref<4x128x512xf32, #tpu.memory_space<vmem>>, vector<1x128x512xf32>
    %2 = vector.shape_cast %1 : vector<1x128x512xf32> to vector<128x512xf32>
    %cst = arith.constant dense<0.000000e+00> : vector<8x512xf32>
    %3 = tpu.matmul %0, %2, %cst {dimension_numbers = #tpu.dot_dimension_numbers<[1], [0], [0], [1], [0, 0, 1, 1], [], []>} : vector<8x128xf32>, vector<128x512xf32>, vector<8x512xf32> -> vector<8x512xf32>
    %c1 = arith.constant 1 : index
    %c0_4 = arith.constant 0 : index
    %c0_5 = arith.constant 0 : index
    %4 = vector.load %arg2[%c1, %c0_4, %c0_5] : memref<4x128x512xf32, #tpu.memory_space<vmem>>, vector<1x128x512xf32>
    %5 = vector.shape_cast %4 : vector<1x128x512xf32> to vector<128x512xf32>
    %cst_6 = arith.constant dense<0.000000e+00> : vector<8x512xf32>
    %6 = tpu.matmul %0, %5, %cst_6 {dimension_numbers = #tpu.dot_dimension_numbers<[1], [0], [0], [1], [0, 0, 1, 1], [], []>} : vector<8x128xf32>, vector<128x512xf32>, vector<8x512xf32> -> vector<8x512xf32>
    %7 = arith.maximumf %3, %6 : vector<8x512xf32>
    %c2 = arith.constant 2 : index
    %c0_7 = arith.constant 0 : index
    %c0_8 = arith.constant 0 : index
    %8 = vector.load %arg2[%c2, %c0_7, %c0_8] : memref<4x128x512xf32, #tpu.memory_space<vmem>>, vector<1x128x512xf32>
    %9 = vector.shape_cast %8 : vector<1x128x512xf32> to vector<128x512xf32>
    %cst_9 = arith.constant dense<0.000000e+00> : vector<8x512xf32>
    %10 = tpu.matmul %0, %9, %cst_9 {dimension_numbers = #tpu.dot_dimension_numbers<[1], [0], [0], [1], [0, 0, 1, 1], [], []>} : vector<8x128xf32>, vector<128x512xf32>, vector<8x512xf32> -> vector<8x512xf32>
    %11 = arith.maximumf %7, %10 : vector<8x512xf32>
    %c3 = arith.constant 3 : index
    %c0_10 = arith.constant 0 : index
    %c0_11 = arith.constant 0 : index
    %12 = vector.load %arg2[%c3, %c0_10, %c0_11] : memref<4x128x512xf32, #tpu.memory_space<vmem>>, vector<1x128x512xf32>
    %13 = vector.shape_cast %12 : vector<1x128x512xf32> to vector<128x512xf32>
    %cst_12 = arith.constant dense<0.000000e+00> : vector<8x512xf32>
    %14 = tpu.matmul %0, %13, %cst_12 {dimension_numbers = #tpu.dot_dimension_numbers<[1], [0], [0], [1], [0, 0, 1, 1], [], []>} : vector<8x128xf32>, vector<128x512xf32>, vector<8x512xf32> -> vector<8x512xf32>
    %15 = arith.maximumf %11, %14 : vector<8x512xf32>
    %c0_13 = arith.constant 0 : index
    %c0_14 = arith.constant 0 : index
    %16 = vector.load %arg3[%c0_13, %c0_14] : memref<1x512xf32, #tpu.memory_space<vmem>>, vector<1x512xf32>
    %17 = vector.broadcast %16 : vector<1x512xf32> to vector<8x512xf32>
    %18 = arith.addf %15, %17 : vector<8x512xf32>
    %cst_15 = arith.constant 0.000000e+00 : f32
    %19 = vector.broadcast %cst_15 : f32 to vector<8x512xf32>
    %20 = arith.maximumf %18, %19 : vector<8x512xf32>
    %c0_16 = arith.constant 0 : index
    %c0_17 = arith.constant 0 : index
    %21 = vector.load %arg4[%c0_16, %c0_17] : memref<512x128xf32, #tpu.memory_space<vmem>>, vector<512x128xf32>
    %cst_18 = arith.constant dense<0.000000e+00> : vector<8x128xf32>
    %22 = tpu.matmul %20, %21, %cst_18 {dimension_numbers = #tpu.dot_dimension_numbers<[1], [0], [0], [1], [0, 0, 1, 1], [], []>} : vector<8x512xf32>, vector<512x128xf32>, vector<8x128xf32> -> vector<8x128xf32>
    %c0_19 = arith.constant 0 : index
    %c0_20 = arith.constant 0 : index
    %23 = vector.load %arg5[%c0_19, %c0_20] : memref<1x128xf32, #tpu.memory_space<vmem>>, vector<1x128xf32>
    %24 = vector.broadcast %23 : vector<1x128xf32> to vector<8x128xf32>
    %25 = arith.addf %22, %24 : vector<8x128xf32>
    %cst_21 = arith.constant 0.000000e+00 : f32
    %26 = vector.broadcast %cst_21 : f32 to vector<8x128xf32>
    %27 = arith.maximumf %25, %26 : vector<8x128xf32>
    %c0_22 = arith.constant 0 : index
    %c0_23 = arith.constant 0 : index
    %28 = vector.load %arg6[%c0_22, %c0_23] : memref<128x128xf32, #tpu.memory_space<vmem>>, vector<128x128xf32>
    %cst_24 = arith.constant dense<0.000000e+00> : vector<8x128xf32>
    %29 = tpu.matmul %27, %28, %cst_24 {dimension_numbers = #tpu.dot_dimension_numbers<[1], [0], [0], [1], [0, 0, 1, 1], [], []>} : vector<8x128xf32>, vector<128x128xf32>, vector<8x128xf32> -> vector<8x128xf32>
    %c0_25 = arith.constant 0 : index
    %c0_26 = arith.constant 0 : index
    %30 = vector.load %arg7[%c0_25, %c0_26] : memref<1x128xf32, #tpu.memory_space<vmem>>, vector<1x128xf32>
    %31 = vector.broadcast %30 : vector<1x128xf32> to vector<8x128xf32>
    %32 = arith.addf %29, %31 : vector<8x128xf32>
    %c0_27 = arith.constant 0 : index
    %c0_28 = arith.constant 0 : index
    %33 = vector.load %arg8[%c0_27, %c0_28] : memref<8x128xf32, #tpu.memory_space<vmem>>, vector<8x128xf32>
    tpu.vector_store %arg8[%c0_27, %c0_28], %32 {strides = array<i32>} : memref<8x128xf32, #tpu.memory_space<vmem>>, vector<8x128xf32>,
    return
  }
  func.func @transform_0(%arg0: i32) -> (i32, i32) {
    %c0_i32 = arith.constant 0 : i32
    %c0_i32_0 = arith.constant 0 : i32
    return %arg0, %c0_i32 : i32, i32
  }
  func.func @transform_1(%arg0: i32) -> (i32, i32, i32) {
    %c0_i32 = arith.constant 0 : i32
    %c0_i32_0 = arith.constant 0 : i32
    %c0_i32_1 = arith.constant 0 : i32
    %c0_i32_2 = arith.constant 0 : i32
    return %c0_i32, %c0_i32_0, %c0_i32_1 : i32, i32, i32
  }
  func.func @transform_2(%arg0: i32) -> (i32, i32) {
    %c0_i32 = arith.constant 0 : i32
    %c0_i32_0 = arith.constant 0 : i32
    %c0_i32_1 = arith.constant 0 : i32
    return %c0_i32, %c0_i32_0 : i32, i32
  }
  func.func @transform_3(%arg0: i32) -> (i32, i32) {
    %c0_i32 = arith.constant 0 : i32
    %c0_i32_0 = arith.constant 0 : i32
    %c0_i32_1 = arith.constant 0 : i32
    return %c0_i32, %c0_i32_0 : i32, i32
  }
  func.func @transform_4(%arg0: i32) -> (i32, i32) {
    %c0_i32 = arith.constant 0 : i32
    %c0_i32_0 = arith.constant 0 : i32
    %c0_i32_1 = arith.constant 0 : i32
    return %c0_i32, %c0_i32_0 : i32, i32
  }
  func.func @transform_5(%arg0: i32) -> (i32, i32) {
    %c0_i32 = arith.constant 0 : i32
    %c0_i32_0 = arith.constant 0 : i32
    %c0_i32_1 = arith.constant 0 : i32
    return %c0_i32, %c0_i32_0 : i32, i32
  }
  func.func @transform_6(%arg0: i32) -> (i32, i32) {
    %c0_i32 = arith.constant 0 : i32
    %c0_i32_0 = arith.constant 0 : i32
    %c0_i32_1 = arith.constant 0 : i32
    return %c0_i32, %c0_i32_0 : i32, i32
  }
  func.func @transform_7(%arg0: i32) -> (i32, i32) {
    %c0_i32 = arith.constant 0 : i32
    %c0_i32_0 = arith.constant 0 : i32
    return %arg0, %c0_i32 : i32, i32
  }
}

</mosaic_0001>

<llo_original>
// kernel: cnn_forward_prepared.1
$region0: #{cnn_forward_prepared.1}
  #allocation0 [shape = 'u32[]', space=smem, size = 0x4, offset = 0x4, fixed_abs, tag = 'smem constant byte address 0x4 - core index']
  #allocation1 [shape = 'u32[144,128]{1,0:T(1,128)}', space=vmem, size = 0x12000, scoped, tag = 'internal scratch']
  %s0 = inlined_call_operand.vmem [shape: f32[8,128], index: 0, kind: input, shape index: {}]
  %s1 = inlined_call_operand.hbm [shape: f32[4,128,512], index: 1, kind: input, shape index: {}]
  %s2 = inlined_call_operand.vmem [shape: f32[1,512], index: 2, kind: input, shape index: {}]
  %s3 = inlined_call_operand.hbm [shape: f32[512,128], index: 3, kind: input, shape index: {}]
  %s4 = inlined_call_operand.vmem [shape: f32[1,128], index: 4, kind: input, shape index: {}]
  %s5 = inlined_call_operand.hbm [shape: f32[128,128], index: 5, kind: input, shape index: {}]
  %s6 = inlined_call_operand.vmem [shape: f32[1,128], index: 6, kind: input, shape index: {}]
  %s7 = inlined_call_operand.vmem [shape: f32[8,128], index: 7, kind: output, shape index: {}]
  %s8 = sld [smem:[#allocation0]]
  $region50: #{cnn_forward_prepared.1} parent=0
    _
  %s10 = ssub.s32 1, %s8
  %s11 = scalar_select 0, %s10, %s8
  $region1: #{cnn_forward_prepared.1} parent=0
    #allocation2 [shape = 'u8[1048576]{0}', space=vmem, size = 0x100000, scoped, tag = 'input window, operand 1, single buffered']
    #allocation3 [shape = 's32[1]{0}', space=sflag, size = 0x4, scoped, tag = 'scoped memory for cnn_forward_prepared.1']
    #allocation4 [shape = 'u8[262144]{0}', space=vmem, size = 0x40000, scoped, tag = 'input window, operand 3, single buffered']
    #allocation5 [shape = 's32[1]{0}', space=sflag, size = 0x4, scoped, tag = 'scoped memory for cnn_forward_prepared.1']
    #allocation6 [shape = 'u8[65536]{0}', space=vmem, size = 0x10000, scoped, tag = 'input window, operand 5, single buffered']
    %12 = vsyncpa [#allocation3], 0
    %13 = vsyncpa [#allocation5], 0
    // Predicated region
    $region2: #{cnn_forward_prepared.1} parent=1 // pred_check
      _
    $region3: #{cnn_forward_prepared.1} parent=1 // pred_check_branch
      %15 = sbr.rel (0) target = $region5
    $region4: #{cnn_forward_prepared.1} parent=1 // pred_region
      _
    $region5: #{cnn_forward_prepared.1} parent=1 // pred_fallthru
      _
    // Predicated region
    $region6: #{cnn_forward_prepared.1} parent=1 // pred_check
      _
    $region7: #{cnn_forward_prepared.1} parent=1 // pred_check_branch
      %17 = sbr.rel (0) target = $region9
    $region8: #{cnn_forward_prepared.1} parent=1 // pred_region
      %s19 = ssub.s32 32768, 32768
      %20 = vsyncadd [#allocation3], %s19
      %s21 = sshll.u32 [#allocation2], 4
      %s22 = int_to_ptr.vmem [resolvable:$true] %s21
      %27 = dma.hbm_to_vmem [thread:$0]  %s1, 32768, %s22, [#allocation3], 512, 512, 32
    $region9: #{cnn_forward_prepared.1} parent=1 // pred_fallthru
      _
    // Predicated region
    $region10: #{cnn_forward_prepared.1} parent=1 // pred_check
      _
    $region11: #{cnn_forward_prepared.1} parent=1 // pred_check_branch
      %29 = sbr.rel (0) target = $region13
    $region12: #{cnn_forward_prepared.1} parent=1 // pred_region
      _
    $region13: #{cnn_forward_prepared.1} parent=1 // pred_fallthru
      _
    // Predicated region
    $region14: #{cnn_forward_prepared.1} parent=1 // pred_check
      _
    $region15: #{cnn_forward_prepared.1} parent=1 // pred_check_branch
      %31 = sbr.rel (0) target = $region17
    $region16: #{cnn_forward_prepared.1} parent=1 // pred_region
      %s33 = ssub.s32 8192, 8192
      %34 = vsyncadd [#allocation5], %s33
      %s35 = sshll.u32 [#allocation4], 4
      %s36 = int_to_ptr.vmem [resolvable:$true] %s35
      %41 = dma.hbm_to_vmem [thread:$0]  %s3, 8192, %s36, [#allocation5], 128, 128, 8
    $region17: #{cnn_forward_prepared.1} parent=1 // pred_fallthru
      _
    // Predicated region
    $region18: #{cnn_forward_prepared.1} parent=1 // pred_check
      _
    $region19: #{cnn_forward_prepared.1} parent=1 // pred_check_branch
      %43 = sbr.rel (0) target = $region21
    $region20: #{cnn_forward_prepared.1} parent=1 // pred_region
      _
    $region21: #{cnn_forward_prepared.1} parent=1 // pred_fallthru
      _
    // Predicated region
    $region22: #{cnn_forward_prepared.1} parent=1 // pred_check
      _
    $region23: #{cnn_forward_prepared.1} parent=1 // pred_check_branch
      %45 = sbr.rel (0) target = $region25
    $region24: #{cnn_forward_prepared.1} parent=1 // pred_region
      %s47 = ssub.s32 2048, 2048
      %48 = vsyncadd [#allocation5], %s47
      %s49 = sshll.u32 [#allocation6], 4
      %s50 = int_to_ptr.vmem [resolvable:$true] %s49
      %55 = dma.hbm_to_vmem [thread:$0]  %s5, 2048, %s50, [#allocation5], 128, 128, 8
    $region25: #{cnn_forward_prepared.1} parent=1 // pred_fallthru
      _
    // Predicated region
    $region26: #{cnn_forward_prepared.1} parent=1 // pred_check
      _
    $region27: #{cnn_forward_prepared.1} parent=1 // pred_check_branch
      %57 = sbr.rel (0) target = $region29
    $region28: #{cnn_forward_prepared.1} parent=1 // pred_region
      _
    $region29: #{cnn_forward_prepared.1} parent=1 // pred_fallthru
      _
    // Predicated region
    $region30: #{cnn_forward_prepared.1} parent=1 // pred_check
      _
    $region31: #{cnn_forward_prepared.1} parent=1 // pred_check_branch
      %59 = sbr.rel (0) target = $region33
    $region32: #{cnn_forward_prepared.1} parent=1 // pred_region
      %60 = dma.done [#allocation3], 32768
    $region33: #{cnn_forward_prepared.1} parent=1 // pred_fallthru
      _
    // Predicated region
    $region34: #{cnn_forward_prepared.1} parent=1 // pred_check
      _
    $region35: #{cnn_forward_prepared.1} parent=1 // pred_check_branch
      %62 = sbr.rel (0) target = $region37
    $region36: #{cnn_forward_prepared.1} parent=1 // pred_region
      %63 = dma.done [#allocation5], 8192
    $region37: #{cnn_forward_prepared.1} parent=1 // pred_fallthru
      _
    // Predicated region
    $region38: #{cnn_forward_prepared.1} parent=1 // pred_check
      _
    $region39: #{cnn_forward_prepared.1} parent=1 // pred_check_branch
      %65 = sbr.rel (0) target = $region41
    $region40: #{cnn_forward_prepared.1} parent=1 // pred_region
      %66 = dma.done [#allocation5], 2048
    $region41: #{cnn_forward_prepared.1} parent=1 // pred_fallthru
      _
    %v67 = vld [vmem:[%s0] sm:$0xff]
    %v68 = vld [vmem:[#allocation2] sm:$0xff]
    %v69 = vld [vmem:[#allocation2 + $0x8] sm:$0xff]
    %v70 = vld [vmem:[#allocation2 + $0x10] sm:$0xff]
    %v71 = vld [vmem:[#allocation2 + $0x18] sm:$0xff]
    %v72 = vld [vmem:[#allocation2 + $0x20] sm:$0xff]
    %v73 = vld [vmem:[#allocation2 + $0x28] sm:$0xff]
    %v74 = vld [vmem:[#allocation2 + $0x30] sm:$0xff]
    %v75 = vld [vmem:[#allocation2 + $0x38] sm:$0xff]
    %v76 = vld [vmem:[#allocation2 + $0x40] sm:$0xff]
    %v77 = vld [vmem:[#allocation2 + $0x48] sm:$0xff]
    %v78 = vld [vmem:[#allocation2 + $0x50] sm:$0xff]
    %v79 = vld [vmem:[#allocation2 + $0x58] sm:$0xff]
    %v80 = vld [vmem:[#allocation2 + $0x60] sm:$0xff]
    %v81 = vld [vmem:[#allocation2 + $0x68] sm:$0xff]
    %v82 = vld [vmem:[#allocation2 + $0x70] sm:$0xff]
    %v83 = vld [vmem:[#allocation2 + $0x78] sm:$0xff]
    %v84 = vld [vmem:[#allocation2 + $0x80] sm:$0xff]
    %v85 = vld [vmem:[#allocation2 + $0x88] sm:$0xff]
    %v86 = vld [vmem:[#allocation2 + $0x90] sm:$0xff]
    %v87 = vld [vmem:[#allocation2 + $0x98] sm:$0xff]
    %v88 = vld [vmem:[#allocation2 + $0xa0] sm:$0xff]
    %v89 = vld [vmem:[#allocation2 + $0xa8] sm:$0xff]
    %v90 = vld [vmem:[#allocation2 + $0xb0] sm:$0xff]
    %v91 = vld [vmem:[#allocation2 + $0xb8] sm:$0xff]
    %v92 = vld [vmem:[#allocation2 + $0xc0] sm:$0xff]
    %v93 = vld [vmem:[#allocation2 + $0xc8] sm:$0xff]
    %v94 = vld [vmem:[#allocation2 + $0xd0] sm:$0xff]
    %v95 = vld [vmem:[#allocation2 + $0xd8] sm:$0xff]
    %v96 = vld [vmem:[#allocation2 + $0xe0] sm:$0xff]
    %v97 = vld [vmem:[#allocation2 + $0xe8] sm:$0xff]
    %v98 = vld [vmem:[#allocation2 + $0xf0] sm:$0xff]
    %v99 = vld [vmem:[#allocation2 + $0xf8] sm:$0xff]
    %v100 = vld [vmem:[#allocation2 + $0x100] sm:$0xff]
    %v101 = vld [vmem:[#allocation2 + $0x108] sm:$0xff]
    %v102 = vld [vmem:[#allocation2 + $0x110] sm:$0xff]
    %v103 = vld [vmem:[#allocation2 + $0x118] sm:$0xff]
    %v104 = vld [vmem:[#allocation2 + $0x120] sm:$0xff]
    %v105 = vld [vmem:[#allocation2 + $0x128] sm:$0xff]
    %v106 = vld [vmem:[#allocation2 + $0x130] sm:$0xff]
    %v107 = vld [vmem:[#allocation2 + $0x138] sm:$0xff]
    %v108 = vld [vmem:[#allocation2 + $0x140] sm:$0xff]
    %v109 = vld [vmem:[#allocation2 + $0x148] sm:$0xff]
    %v110 = vld [vmem:[#allocation2 + $0x150] sm:$0xff]
    %v111 = vld [vmem:[#allocation2 + $0x158] sm:$0xff]
    %v112 = vld [vmem:[#allocation2 + $0x160] sm:$0xff]
    %v113 = vld [vmem:[#allocation2 + $0x168] sm:$0xff]
    %v114 = vld [vmem:[#allocation2 + $0x170] sm:$0xff]
    %v115 = vld [vmem:[#allocation2 + $0x178] sm:$0xff]
    %v116 = vld [vmem:[#allocation2 + $0x180] sm:$0xff]
    %v117 = vld [vmem:[#allocation2 + $0x188] sm:$0xff]
    %v118 = vld [vmem:[#allocation2 + $0x190] sm:$0xff]
    %v119 = vld [vmem:[#allocation2 + $0x198] sm:$0xff]
    %v120 = vld [vmem:[#allocation2 + $0x1a0] sm:$0xff]
    %v121 = vld [vmem:[#allocation2 + $0x1a8] sm:$0xff]
    %v122 = vld [vmem:[#allocation2 + $0x1b0] sm:$0xff]
    %v123 = vld [vmem:[#allocation2 + $0x1b8] sm:$0xff]
    %v124 = vld [vmem:[#allocation2 + $0x1c0] sm:$0xff]
    %v125 = vld [vmem:[#allocation2 + $0x1c8] sm:$0xff]
    %v126 = vld [vmem:[#allocation2 + $0x1d0] sm:$0xff]
    %v127 = vld [vmem:[#allocation2 + $0x1d8] sm:$0xff]
    %v128 = vld [vmem:[#allocation2 + $0x1e0] sm:$0xff]
    %v129 = vld [vmem:[#allocation2 + $0x1e8] sm:$0xff]
    %v130 = vld [vmem:[#allocation2 + $0x1f0] sm:$0xff]
    %v131 = vld [vmem:[#allocation2 + $0x1f8] sm:$0xff]
    %132 = vmatprep.subr.mxu0 %v69
    %133 = vmatpush1.msra.mxu0 %v68
    %134 = vmatprep.subr.mxu0 %v73
    %135 = vmatpush1.msra.mxu0 %v72
    %136 = vmatprep.subr.mxu0 %v77
    %137 = vmatpush1.msra.mxu0 %v76
    %138 = vmatprep.subr.mxu0 %v81
    %139 = vmatpush1.msra.mxu0 %v80
    %140 = vmatprep.subr.mxu0 %v85
    %141 = vmatpush1.msra.mxu0 %v84
    %142 = vmatprep.subr.mxu0 %v89
    %143 = vmatpush1.msra.mxu0 %v88
    %144 = vmatprep.subr.mxu0 %v93
    %145 = vmatpush1.msra.mxu0 %v92
    %146 = vmatprep.subr.mxu0 %v97
    %147 = vmatpush1.msra.mxu0 %v96
    %148 = vmatprep.subr.mxu0 %v101
    %149 = vmatpush1.msra.mxu0 %v100
    %150 = vmatprep.subr.mxu0 %v105
    %151 = vmatpush1.msra.mxu0 %v104
    %152 = vmatprep.subr.mxu0 %v109
    %153 = vmatpush1.msra.mxu0 %v108
    %154 = vmatprep.subr.mxu0 %v113
    %155 = vmatpush1.msra.mxu0 %v112
    %156 = vmatprep.subr.mxu0 %v117
    %157 = vmatpush1.msra.mxu0 %v116
    %158 = vmatprep.subr.mxu0 %v121
    %159 = vmatpush1.msra.mxu0 %v120
    %160 = vmatprep.subr.mxu0 %v125
    %161 = vmatpush1.msra.mxu0 %v124
    %162 = vmatprep.subr.mxu0 %v129
    %163 = vmatpush1.msra.mxu0 %v128
    %164 = vmatprep.subr.mxu0 0.0
    %165 = vmatpush1.msra.mxu0 0.0
    %166 = vmatprep.subr.mxu0 0.0
    %167 = vmatpush1.msra.mxu0 0.0
    %168 = vmatprep.subr.mxu0 0.0
    %169 = vmatpush1.msra.mxu0 0.0
    %170 = vmatprep.subr.mxu0 0.0
    %171 = vmatpush1.msra.mxu0 0.0
    %172 = vmatprep.subr.mxu0 0.0
    %173 = vmatpush1.msra.mxu0 0.0
    %174 = vmatprep.subr.mxu0 0.0
    %175 = vmatpush1.msra.mxu0 0.0
    %176 = vmatprep.subr.mxu0 0.0
    %177 = vmatpush1.msra.mxu0 0.0
    %178 = vmatprep.subr.mxu0 0.0
    %179 = vmatpush1.msra.mxu0 0.0
    %180 = vmatprep.subr.mxu0 0.0
    %181 = vmatpush1.msra.mxu0 0.0
    %182 = vmatprep.subr.mxu0 0.0
    %183 = vmatpush1.msra.mxu0 0.0
    %184 = vmatprep.subr.mxu0 0.0
    %185 = vmatpush1.msra.mxu0 0.0
    %186 = vmatprep.subr.mxu0 0.0
    %187 = vmatpush1.msra.mxu0 0.0
    %188 = vmatprep.subr.mxu0 0.0
    %189 = vmatpush1.msra.mxu0 0.0
    %190 = vmatprep.subr.mxu0 0.0
    %191 = vmatpush1.msra.mxu0 0.0
    %192 = vmatprep.subr.mxu0 0.0
    %193 = vmatpush1.msra.mxu0 0.0
    %194 = vmatprep.subr.mxu0 0.0
    %195 = vmatpush1.msra.mxu0 0.0
    %196 = vmatprep.mubr.f32.mxu0 0.0
    %197 = vmatmul.mubr.f32.gmra.mrb[0].mxu0 %v67
    %v198 = vpop.f32.mrb[0].mxu0
    %v199 = vadd.f32 0.0, %v198
    %v200 = vpop.f32.mrb[0].mxu0
    %v201 = vadd.f32 0.0, %v200
    %202 = vdwg.mxu0
    %203 = vmatprep.subr.mxu0 %v71
    %204 = vmatpush1.msra.mxu0 %v70
    %205 = vmatprep.subr.mxu0 %v75
    %206 = vmatpush1.msra.mxu0 %v74
    %207 = vmatprep.subr.mxu0 %v79
    %208 = vmatpush1.msra.mxu0 %v78
    %209 = vmatprep.subr.mxu0 %v83
    %210 = vmatpush1.msra.mxu0 %v82
    %211 = vmatprep.subr.mxu0 %v87
    %212 = vmatpush1.msra.mxu0 %v86
    %213 = vmatprep.subr.mxu0 %v91
    %214 = vmatpush1.msra.mxu0 %v90
    %215 = vmatprep.subr.mxu0 %v95
    %216 = vmatpush1.msra.mxu0 %v94
    %217 = vmatprep.subr.mxu0 %v99
    %218 = vmatpush1.msra.mxu0 %v98
    %219 = vmatprep.subr.mxu0 %v103
    %220 = vmatpush1.msra.mxu0 %v102
    %221 = vmatprep.subr.mxu0 %v107
    %222 = vmatpush1.msra.mxu0 %v106
    %223 = vmatprep.subr.mxu0 %v111
    %224 = vmatpush1.msra.mxu0 %v110
    %225 = vmatprep.subr.mxu0 %v115
    %226 = vmatpush1.msra.mxu0 %v114
    %227 = vmatprep.subr.mxu0 %v119
    %228 = vmatpush1.msra.mxu0 %v118
    %229 = vmatprep.subr.mxu0 %v123
    %230 = vmatpush1.msra.mxu0 %v122
    %231 = vmatprep.subr.mxu0 %v127
    %232 = vmatpush1.msra.mxu0 %v126
    %233 = vmatprep.subr.mxu0 %v131
    %234 = vmatpush1.msra.mxu0 %v130
    %235 = vmatprep.subr.mxu0 0.0
    %236 = vmatpush1.msra.mxu0 0.0
    %237 = vmatprep.subr.mxu0 0.0
    %238 = vmatpush1.msra.mxu0 0.0
    %239 = vmatprep.subr.mxu0 0.0
    %240 = vmatpush1.msra.mxu0 0.0
    %241 = vmatprep.subr.mxu0 0.0
    %242 = vmatpush1.msra.mxu0 0.0
    %243 = vmatprep.subr.mxu0 0.0
    %244 = vmatpush1.msra.mxu0 0.0
    %245 = vmatprep.subr.mxu0 0.0
    %246 = vmatpush1.msra.mxu0 0.0
    %247 = vmatprep.subr.mxu0 0.0
    %248 = vmatpush1.msra.mxu0 0.0
    %249 = vmatprep.subr.mxu0 0.0
    %250 = vmatpush1.msra.mxu0 0.0
    %251 = vmatprep.subr.mxu0 0.0
    %252 = vmatpush1.msra.mxu0 0.0
    %253 = vmatprep.subr.mxu0 0.0
    %254 = vmatpush1.msra.mxu0 0.0
    %255 = vmatprep.subr.mxu0 0.0
    %256 = vmatpush1.msra.mxu0 0.0
    %257 = vmatprep.subr.mxu0 0.0
    %258 = vmatpush1.msra.mxu0 0.0
    %259 = vmatprep.subr.mxu0 0.0
    %260 = vmatpush1.msra.mxu0 0.0
    %261 = vmatprep.subr.mxu0 0.0
    %262 = vmatpush1.msra.mxu0 0.0
    %263 = vmatprep.subr.mxu0 0.0
    %264 = vmatpush1.msra.mxu0 0.0
    %265 = vmatprep.subr.mxu0 0.0
    %266 = vmatpush1.msra.mxu0 0.0
    %267 = vmatprep.mubr.f32.mxu0 0.0
    %268 = vmatmul.mubr.f32.gmra.mrb[0].mxu0 %v67
    %v269 = vpop.f32.mrb[0].mxu0
    %v270 = vadd.f32 0.0, %v269
    %v271 = vpop.f32.mrb[0].mxu0
    %v272 = vadd.f32 0.0, %v271
    %273 = vdwg.mxu0
    %s274 = scalar_lea.vmem [#allocation2], 512
    %v275 = vld [vmem:[%s274] sm:$0xff]
    %v276 = vld [vmem:[%s274 + $0x8] sm:$0xff]
    %v277 = vld [vmem:[%s274 + $0x10] sm:$0xff]
    %v278 = vld [vmem:[%s274 + $0x18] sm:$0xff]
    %v279 = vld [vmem:[%s274 + $0x20] sm:$0xff]
    %v280 = vld [vmem:[%s274 + $0x28] sm:$0xff]
    %v281 = vld [vmem:[%s274 + $0x30] sm:$0xff]
    %v282 = vld [vmem:[%s274 + $0x38] sm:$0xff]
    %v283 = vld [vmem:[%s274 + $0x40] sm:$0xff]
    %v284 = vld [vmem:[%s274 + $0x48] sm:$0xff]
    %v285 = vld [vmem:[%s274 + $0x50] sm:$0xff]
    %v286 = vld [vmem:[%s274 + $0x58] sm:$0xff]
    %v287 = vld [vmem:[%s274 + $0x60] sm:$0xff]
    %v288 = vld [vmem:[%s274 + $0x68] sm:$0xff]
    %v289 = vld [vmem:[%s274 + $0x70] sm:$0xff]
    %v290 = vld [vmem:[%s274 + $0x78] sm:$0xff]
    %v291 = vld [vmem:[%s274 + $0x80] sm:$0xff]
    %v292 = vld [vmem:[%s274 + $0x88] sm:$0xff]
    %v293 = vld [vmem:[%s274 + $0x90] sm:$0xff]
    %v294 = vld [vmem:[%s274 + $0x98] sm:$0xff]
    %v295 = vld [vmem:[%s274 + $0xa0] sm:$0xff]
    %v296 = vld [vmem:[%s274 + $0xa8] sm:$0xff]
    %v297 = vld [vmem:[%s274 + $0xb0] sm:$0xff]
    %v298 = vld [vmem:[%s274 + $0xb8] sm:$0xff]
    %v299 = vld [vmem:[%s274 + $0xc0] sm:$0xff]
    %v300 = vld [vmem:[%s274 + $0xc8] sm:$0xff]
    %v301 = vld [vmem:[%s274 + $0xd0] sm:$0xff]
    %v302 = vld [vmem:[%s274 + $0xd8] sm:$0xff]
    %v303 = vld [vmem:[%s274 + $0xe0] sm:$0xff]
    %v304 = vld [vmem:[%s274 + $0xe8] sm:$0xff]
    %v305 = vld [vmem:[%s274 + $0xf0] sm:$0xff]
    %v306 = vld [vmem:[%s274 + $0xf8] sm:$0xff]
    %v307 = vld [vmem:[%s274 + $0x100] sm:$0xff]
    %v308 = vld [vmem:[%s274 + $0x108] sm:$0xff]
    %v309 = vld [vmem:[%s274 + $0x110] sm:$0xff]
    %v310 = vld [vmem:[%s274 + $0x118] sm:$0xff]
    %v311 = vld [vmem:[%s274 + $0x120] sm:$0xff]
    %v312 = vld [vmem:[%s274 + $0x128] sm:$0xff]
    %v313 = vld [vmem:[%s274 + $0x130] sm:$0xff]
    %v314 = vld [vmem:[%s274 + $0x138] sm:$0xff]
    %v315 = vld [vmem:[%s274 + $0x140] sm:$0xff]
    %v316 = vld [vmem:[%s274 + $0x148] sm:$0xff]
    %v317 = vld [vmem:[%s274 + $0x150] sm:$0xff]
    %v318 = vld [vmem:[%s274 + $0x158] sm:$0xff]
    %v319 = vld [vmem:[%s274 + $0x160] sm:$0xff]
    %v320 = vld [vmem:[%s274 + $0x168] sm:$0xff]
    %v321 = vld [vmem:[%s274 + $0x170] sm:$0xff]
    %v322 = vld [vmem:[%s274 + $0x178] sm:$0xff]
    %v323 = vld [vmem:[%s274 + $0x180] sm:$0xff]
    %v324 = vld [vmem:[%s274 + $0x188] sm:$0xff]
    %v325 = vld [vmem:[%s274 + $0x190] sm:$0xff]
    %v326 = vld [vmem:[%s274 + $0x198] sm:$0xff]
    %v327 = vld [vmem:[%s274 + $0x1a0] sm:$0xff]
    %v328 = vld [vmem:[%s274 + $0x1a8] sm:$0xff]
    %v329 = vld [vmem:[%s274 + $0x1b0] sm:$0xff]
    %v330 = vld [vmem:[%s274 + $0x1b8] sm:$0xff]
    %v331 = vld [vmem:[%s274 + $0x1c0] sm:$0xff]
    %v332 = vld [vmem:[%s274 + $0x1c8] sm:$0xff]
    %v333 = vld [vmem:[%s274 + $0x1d0] sm:$0xff]
    %v334 = vld [vmem:[%s274 + $0x1d8] sm:$0xff]
    %v335 = vld [vmem:[%s274 + $0x1e0] sm:$0xff]
    %v336 = vld [vmem:[%s274 + $0x1e8] sm:$0xff]
    %v337 = vld [vmem:[%s274 + $0x1f0] sm:$0xff]
    %v338 = vld [vmem:[%s274 + $0x1f8] sm:$0xff]
    %339 = vmatprep.subr.mxu0 %v276
    %340 = vmatpush1.msra.mxu0 %v275
    %341 = vmatprep.subr.mxu0 %v280
    %342 = vmatpush1.msra.mxu0 %v279
    %343 = vmatprep.subr.mxu0 %v284
    %344 = vmatpush1.msra.mxu0 %v283
    %345 = vmatprep.subr.mxu0 %v288
    %346 = vmatpush1.msra.mxu0 %v287
    %347 = vmatprep.subr.mxu0 %v292
    %348 = vmatpush1.msra.mxu0 %v291
    %349 = vmatprep.subr.mxu0 %v296
    %350 = vmatpush1.msra.mxu0 %v295
    %351 = vmatprep.subr.mxu0 %v300
    %352 = vmatpush1.msra.mxu0 %v299
    %353 = vmatprep.subr.mxu0 %v304
    %354 = vmatpush1.msra.mxu0 %v303
    %355 = vmatprep.subr.mxu0 %v308
    %356 = vmatpush1.msra.mxu0 %v307
    %357 = vmatprep.subr.mxu0 %v312
    %358 = vmatpush1.msra.mxu0 %v311
    %359 = vmatprep.subr.mxu0 %v316
    %360 = vmatpush1.msra.mxu0 %v315
    %361 = vmatprep.subr.mxu0 %v320
    %362 = vmatpush1.msra.mxu0 %v319
    %363 = vmatprep.subr.mxu0 %v324
    %364 = vmatpush1.msra.mxu0 %v323
    %365 = vmatprep.subr.mxu0 %v328
    %366 = vmatpush1.msra.mxu0 %v327
    %367 = vmatprep.subr.mxu0 %v332
    %368 = vmatpush1.msra.mxu0 %v331
    %369 = vmatprep.subr.mxu0 %v336
    %370 = vmatpush1.msra.mxu0 %v335
    %371 = vmatprep.subr.mxu0 0.0
    %372 = vmatpush1.msra.mxu0 0.0
    %373 = vmatprep.subr.mxu0 0.0
    %374 = vmatpush1.msra.mxu0 0.0
    %375 = vmatprep.subr.mxu0 0.0
    %376 = vmatpush1.msra.mxu0 0.0
    %377 = vmatprep.subr.mxu0 0.0
    %378 = vmatpush1.msra.mxu0 0.0
    %379 = vmatprep.subr.mxu0 0.0
    %380 = vmatpush1.msra.mxu0 0.0
    %381 = vmatprep.subr.mxu0 0.0
    %382 = vmatpush1.msra.mxu0 0.0
    %383 = vmatprep.subr.mxu0 0.0
    %384 = vmatpush1.msra.mxu0 0.0
    %385 = vmatprep.subr.mxu0 0.0
    %386 = vmatpush1.msra.mxu0 0.0
    %387 = vmatprep.subr.mxu0 0.0
    %388 = vmatpush1.msra.mxu0 0.0
    %389 = vmatprep.subr.mxu0 0.0
    %390 = vmatpush1.msra.mxu0 0.0
    %391 = vmatprep.subr.mxu0 0.0
    %392 = vmatpush1.msra.mxu0 0.0
    %393 = vmatprep.subr.mxu0 0.0
    %394 = vmatpush1.msra.mxu0 0.0
    %395 = vmatprep.subr.mxu0 0.0
    %396 = vmatpush1.msra.mxu0 0.0
    %397 = vmatprep.subr.mxu0 0.0
    %398 = vmatpush1.msra.mxu0 0.0
    %399 = vmatprep.subr.mxu0 0.0
    %400 = vmatpush1.msra.mxu0 0.0
    %401 = vmatprep.subr.mxu0 0.0
    %402 = vmatpush1.msra.mxu0 0.0
    %403 = vmatprep.mubr.f32.mxu0 0.0
    %404 = vmatmul.mubr.f32.gmra.mrb[0].mxu0 %v67
    %v405 = vpop.f32.mrb[0].mxu0
    %v406 = vadd.f32 0.0, %v405
    %v407 = vpop.f32.mrb[0].mxu0
    %v408 = vadd.f32 0.0, %v407
    %409 = vdwg.mxu0
    %410 = vmatprep.subr.mxu0 %v278
    %411 = vmatpush1.msra.mxu0 %v277
    %412 = vmatprep.subr.mxu0 %v282
    %413 = vmatpush1.msra.mxu0 %v281
    %414 = vmatprep.subr.mxu0 %v286
    %415 = vmatpush1.msra.mxu0 %v285
    %416 = vmatprep.subr.mxu0 %v290
    %417 = vmatpush1.msra.mxu0 %v289
    %418 = vmatprep.subr.mxu0 %v294
    %419 = vmatpush1.msra.mxu0 %v293
    %420 = vmatprep.subr.mxu0 %v298
    %421 = vmatpush1.msra.mxu0 %v297
    %422 = vmatprep.subr.mxu0 %v302
    %423 = vmatpush1.msra.mxu0 %v301
    %424 = vmatprep.subr.mxu0 %v306
    %425 = vmatpush1.msra.mxu0 %v305
    %426 = vmatprep.subr.mxu0 %v310
    %427 = vmatpush1.msra.mxu0 %v309
    %428 = vmatprep.subr.mxu0 %v314
    %429 = vmatpush1.msra.mxu0 %v313
    %430 = vmatprep.subr.mxu0 %v318
    %431 = vmatpush1.msra.mxu0 %v317
    %432 = vmatprep.subr.mxu0 %v322
    %433 = vmatpush1.msra.mxu0 %v321
    %434 = vmatprep.subr.mxu0 %v326
    %435 = vmatpush1.msra.mxu0 %v325
    %436 = vmatprep.subr.mxu0 %v330
    %437 = vmatpush1.msra.mxu0 %v329
    %438 = vmatprep.subr.mxu0 %v334
    %439 = vmatpush1.msra.mxu0 %v333
    %440 = vmatprep.subr.mxu0 %v338
    %441 = vmatpush1.msra.mxu0 %v337
    %442 = vmatprep.subr.mxu0 0.0
    %443 = vmatpush1.msra.mxu0 0.0
    %444 = vmatprep.subr.mxu0 0.0
    %445 = vmatpush1.msra.mxu0 0.0
    %446 = vmatprep.subr.mxu0 0.0
    %447 = vmatpush1.msra.mxu0 0.0
    %448 = vmatprep.subr.mxu0 0.0
    %449 = vmatpush1.msra.mxu0 0.0
    %450 = vmatprep.subr.mxu0 0.0
    %451 = vmatpush1.msra.mxu0 0.0
    %452 = vmatprep.subr.mxu0 0.0
    %453 = vmatpush1.msra.mxu0 0.0
    %454 = vmatprep.subr.mxu0 0.0
    %455 = vmatpush1.msra.mxu0 0.0
    %456 = vmatprep.subr.mxu0 0.0
    %457 = vmatpush1.msra.mxu0 0.0
    %458 = vmatprep.subr.mxu0 0.0
    %459 = vmatpush1.msra.mxu0 0.0
    %460 = vmatprep.subr.mxu0 0.0
    %461 = vmatpush1.msra.mxu0 0.0
    %462 = vmatprep.subr.mxu0 0.0
    %463 = vmatpush1.msra.mxu0 0.0
    %464 = vmatprep.subr.mxu0 0.0
    %465 = vmatpush1.msra.mxu0 0.0
    %466 = vmatprep.subr.mxu0 0.0
    %467 = vmatpush1.msra.mxu0 0.0
    %468 = vmatprep.subr.mxu0 0.0
    %469 = vmatpush1.msra.mxu0 0.0
    %470 = vmatprep.subr.mxu0 0.0
    %471 = vmatpush1.msra.mxu0 0.0
    %472 = vmatprep.subr.mxu0 0.0
    %473 = vmatpush1.msra.mxu0 0.0
    %474 = vmatprep.mubr.f32.mxu0 0.0
    %475 = vmatmul.mubr.f32.gmra.mrb[0].mxu0 %v67
    %v476 = vpop.f32.mrb[0].mxu0
    %v477 = vadd.f32 0.0, %v476
    %v478 = vpop.f32.mrb[0].mxu0
    %v479 = vadd.f32 0.0, %v478
    %480 = vdwg.mxu0
    %v481 = vmax.f32 %v199, %v406
    %v482 = vmax.f32 %v201, %v408
    %v483 = vmax.f32 %v270, %v477
    %v484 = vmax.f32 %v272, %v479
    %s485 = scalar_lea.vmem [#allocation2], 1024
    %v486 = vld [vmem:[%s485] sm:$0xff]
    %v487 = vld [vmem:[%s485 + $0x8] sm:$0xff]
    %v488 = vld [vmem:[%s485 + $0x10] sm:$0xff]
    %v489 = vld [vmem:[%s485 + $0x18] sm:$0xff]
    %v490 = vld [vmem:[%s485 + $0x20] sm:$0xff]
    %v491 = vld [vmem:[%s485 + $0x28] sm:$0xff]
    %v492 = vld [vmem:[%s485 + $0x30] sm:$0xff]
    %v493 = vld [vmem:[%s485 + $0x38] sm:$0xff]
    %v494 = vld [vmem:[%s485 + $0x40] sm:$0xff]
    %v495 = vld [vmem:[%s485 + $0x48] sm:$0xff]
    %v496 = vld [vmem:[%s485 + $0x50] sm:$0xff]
    %v497 = vld [vmem:[%s485 + $0x58] sm:$0xff]
    %v498 = vld [vmem:[%s485 + $0x60] sm:$0xff]
    %v499 = vld [vmem:[%s485 + $0x68] sm:$0xff]
    %v500 = vld [vmem:[%s485 + $0x70] sm:$0xff]
    %v501 = vld [vmem:[%s485 + $0x78] sm:$0xff]
    %v502 = vld [vmem:[%s485 + $0x80] sm:$0xff]
    %v503 = vld [vmem:[%s485 + $0x88] sm:$0xff]
    %v504 = vld [vmem:[%s485 + $0x90] sm:$0xff]
    %v505 = vld [vmem:[%s485 + $0x98] sm:$0xff]
    %v506 = vld [vmem:[%s485 + $0xa0] sm:$0xff]
    %v507 = vld [vmem:[%s485 + $0xa8] sm:$0xff]
    %v508 = vld [vmem:[%s485 + $0xb0] sm:$0xff]
    %v509 = vld [vmem:[%s485 + $0xb8] sm:$0xff]
    %v510 = vld [vmem:[%s485 + $0xc0] sm:$0xff]
    %v511 = vld [vmem:[%s485 + $0xc8] sm:$0xff]
    %v512 = vld [vmem:[%s485 + $0xd0] sm:$0xff]
    %v513 = vld [vmem:[%s485 + $0xd8] sm:$0xff]
    %v514 = vld [vmem:[%s485 + $0xe0] sm:$0xff]
    %v515 = vld [vmem:[%s485 + $0xe8] sm:$0xff]
    %v516 = vld [vmem:[%s485 + $0xf0] sm:$0xff]
    %v517 = vld [vmem:[%s485 + $0xf8] sm:$0xff]
    %v518 = vld [vmem:[%s485 + $0x100] sm:$0xff]
    %v519 = vld [vmem:[%s485 + $0x108] sm:$0xff]
    %v520 = vld [vmem:[%s485 + $0x110] sm:$0xff]
    %v521 = vld [vmem:[%s485 + $0x118] sm:$0xff]
    %v522 = vld [vmem:[%s485 + $0x120] sm:$0xff]
    %v523 = vld [vmem:[%s485 + $0x128] sm:$0xff]
    %v524 = vld [vmem:[%s485 + $0x130] sm:$0xff]
    %v525 = vld [vmem:[%s485 + $0x138] sm:$0xff]
    %v526 = vld [vmem:[%s485 + $0x140] sm:$0xff]
    %v527 = vld [vmem:[%s485 + $0x148] sm:$0xff]
    %v528 = vld [vmem:[%s485 + $0x150] sm:$0xff]
    %v529 = vld [vmem:[%s485 + $0x158] sm:$0xff]
    %v530 = vld [vmem:[%s485 + $0x160] sm:$0xff]
    %v531 = vld [vmem:[%s485 + $0x168] sm:$0xff]
    %v532 = vld [vmem:[%s485 + $0x170] sm:$0xff]
    %v533 = vld [vmem:[%s485 + $0x178] sm:$0xff]
    %v534 = vld [vmem:[%s485 + $0x180] sm:$0xff]
    %v535 = vld [vmem:[%s485 + $0x188] sm:$0xff]
    %v536 = vld [vmem:[%s485 + $0x190] sm:$0xff]
    %v537 = vld [vmem:[%s485 + $0x198] sm:$0xff]
    %v538 = vld [vmem:[%s485 + $0x1a0] sm:$0xff]
    %v539 = vld [vmem:[%s485 + $0x1a8] sm:$0xff]
    %v540 = vld [vmem:[%s485 + $0x1b0] sm:$0xff]
    %v541 = vld [vmem:[%s485 + $0x1b8] sm:$0xff]
    %v542 = vld [vmem:[%s485 + $0x1c0] sm:$0xff]
    %v543 = vld [vmem:[%s485 + $0x1c8] sm:$0xff]
    %v544 = vld [vmem:[%s485 + $0x1d0] sm:$0xff]
    %v545 = vld [vmem:[%s485 + $0x1d8] sm:$0xff]
    %v546 = vld [vmem:[%s485 + $0x1e0] sm:$0xff]
    %v547 = vld [vmem:[%s485 + $0x1e8] sm:$0xff]
    %v548 = vld [vmem:[%s485 + $0x1f0] sm:$0xff]
    %v549 = vld [vmem:[%s485 + $0x1f8] sm:$0xff]
    %550 = vmatprep.subr.mxu0 %v487
    %551 = vmatpush1.msra.mxu0 %v486
    %552 = vmatprep.subr.mxu0 %v491
    %553 = vmatpush1.msra.mxu0 %v490
    %554 = vmatprep.subr.mxu0 %v495
    %555 = vmatpush1.msra.mxu0 %v494
    %556 = vmatprep.subr.mxu0 %v499
    %557 = vmatpush1.msra.mxu0 %v498
    %558 = vmatprep.subr.mxu0 %v503
    %559 = vmatpush1.msra.mxu0 %v502
    %560 = vmatprep.subr.mxu0 %v507
    %561 = vmatpush1.msra.mxu0 %v506
    %562 = vmatprep.subr.mxu0 %v511
    %563 = vmatpush1.msra.mxu0 %v510
    %564 = vmatprep.subr.mxu0 %v515
    %565 = vmatpush1.msra.mxu0 %v514
    %566 = vmatprep.subr.mxu0 %v519
    %567 = vmatpush1.msra.mxu0 %v518
    %568 = vmatprep.subr.mxu0 %v523
    %569 = vmatpush1.msra.mxu0 %v522
    %570 = vmatprep.subr.mxu0 %v527
    %571 = vmatpush1.msra.mxu0 %v526
    %572 = vmatprep.subr.mxu0 %v531
    %573 = vmatpush1.msra.mxu0 %v530
    %574 = vmatprep.subr.mxu0 %v535
    %575 = vmatpush1.msra.mxu0 %v534
    %576 = vmatprep.subr.mxu0 %v539
    %577 = vmatpush1.msra.mxu0 %v538
    %578 = vmatprep.subr.mxu0 %v543
    %579 = vmatpush1.msra.mxu0 %v542
    %580 = vmatprep.subr.mxu0 %v547
    %581 = vmatpush1.msra.mxu0 %v546
    %582 = vmatprep.subr.mxu0 0.0
    %583 = vmatpush1.msra.mxu0 0.0
    %584 = vmatprep.subr.mxu0 0.0
    %585 = vmatpush1.msra.mxu0 0.0
    %586 = vmatprep.subr.mxu0 0.0
    %587 = vmatpush1.msra.mxu0 0.0
    %588 = vmatprep.subr.mxu0 0.0
    %589 = vmatpush1.msra.mxu0 0.0
    %590 = vmatprep.subr.mxu0 0.0
    %591 = vmatpush1.msra.mxu0 0.0
    %592 = vmatprep.subr.mxu0 0.0
    %593 = vmatpush1.msra.mxu0 0.0
    %594 = vmatprep.subr.mxu0 0.0
    %595 = vmatpush1.msra.mxu0 0.0
    %596 = vmatprep.subr.mxu0 0.0
    %597 = vmatpush1.msra.mxu0 0.0
    %598 = vmatprep.subr.mxu0 0.0
    %599 = vmatpush1.msra.mxu0 0.0
    %600 = vmatprep.subr.mxu0 0.0
    %601 = vmatpush1.msra.mxu0 0.0
    %602 = vmatprep.subr.mxu0 0.0
    %603 = vmatpush1.msra.mxu0 0.0
    %604 = vmatprep.subr.mxu0 0.0
    %605 = vmatpush1.msra.mxu0 0.0
    %606 = vmatprep.subr.mxu0 0.0
    %607 = vmatpush1.msra.mxu0 0.0
    %608 = vmatprep.subr.mxu0 0.0
    %609 = vmatpush1.msra.mxu0 0.0
    %610 = vmatprep.subr.mxu0 0.0
    %611 = vmatpush1.msra.mxu0 0.0
    %612 = vmatprep.subr.mxu0 0.0
    %613 = vmatpush1.msra.mxu0 0.0
    %614 = vmatprep.mubr.f32.mxu0 0.0
    %615 = vmatmul.mubr.f32.gmra.mrb[0].mxu0 %v67
    %v616 = vpop.f32.mrb[0].mxu0
    %v617 = vadd.f32 0.0, %v616
    %v618 = vpop.f32.mrb[0].mxu0
    %v619 = vadd.f32 0.0, %v618
    %620 = vdwg.mxu0
    %621 = vmatprep.subr.mxu0 %v489
    %622 = vmatpush1.msra.mxu0 %v488
    %623 = vmatprep.subr.mxu0 %v493
    %624 = vmatpush1.msra.mxu0 %v492
    %625 = vmatprep.subr.mxu0 %v497
    %626 = vmatpush1.msra.mxu0 %v496
    %627 = vmatprep.subr.mxu0 %v501
    %628 = vmatpush1.msra.mxu0 %v500
    %629 = vmatprep.subr.mxu0 %v505
    %630 = vmatpush1.msra.mxu0 %v504
    %631 = vmatprep.subr.mxu0 %v509
    %632 = vmatpush1.msra.mxu0 %v508
    %633 = vmatprep.subr.mxu0 %v513
    %634 = vmatpush1.msra.mxu0 %v512
    %635 = vmatprep.subr.mxu0 %v517
    %636 = vmatpush1.msra.mxu0 %v516
    %637 = vmatprep.subr.mxu0 %v521
    %638 = vmatpush1.msra.mxu0 %v520
    %639 = vmatprep.subr.mxu0 %v525
    %640 = vmatpush1.msra.mxu0 %v524
    %641 = vmatprep.subr.mxu0 %v529
    %642 = vmatpush1.msra.mxu0 %v528
    %643 = vmatprep.subr.mxu0 %v533
    %644 = vmatpush1.msra.mxu0 %v532
    %645 = vmatprep.subr.mxu0 %v537
    %646 = vmatpush1.msra.mxu0 %v536
    %647 = vmatprep.subr.mxu0 %v541
    %648 = vmatpush1.msra.mxu0 %v540
    %649 = vmatprep.subr.mxu0 %v545
    %650 = vmatpush1.msra.mxu0 %v544
    %651 = vmatprep.subr.mxu0 %v549
    %652 = vmatpush1.msra.mxu0 %v548
    %653 = vmatprep.subr.mxu0 0.0
    %654 = vmatpush1.msra.mxu0 0.0
    %655 = vmatprep.subr.mxu0 0.0
    %656 = vmatpush1.msra.mxu0 0.0
    %657 = vmatprep.subr.mxu0 0.0
    %658 = vmatpush1.msra.mxu0 0.0
    %659 = vmatprep.subr.mxu0 0.0
    %660 = vmatpush1.msra.mxu0 0.0
    %661 = vmatprep.subr.mxu0 0.0
    %662 = vmatpush1.msra.mxu0 0.0
    %663 = vmatprep.subr.mxu0 0.0
    %664 = vmatpush1.msra.mxu0 0.0
    %665 = vmatprep.subr.mxu0 0.0
    %666 = vmatpush1.msra.mxu0 0.0
    %667 = vmatprep.subr.mxu0 0.0
    %668 = vmatpush1.msra.mxu0 0.0
    %669 = vmatprep.subr.mxu0 0.0
    %670 = vmatpush1.msra.mxu0 0.0
    %671 = vmatprep.subr.mxu0 0.0
    %672 = vmatpush1.msra.mxu0 0.0
    %673 = vmatprep.subr.mxu0 0.0
    %674 = vmatpush1.msra.mxu0 0.0
    %675 = vmatprep.subr.mxu0 0.0
    %676 = vmatpush1.msra.mxu0 0.0
    %677 = vmatprep.subr.mxu0 0.0
    %678 = vmatpush1.msra.mxu0 0.0
    %679 = vmatprep.subr.mxu0 0.0
    %680 = vmatpush1.msra.mxu0 0.0
    %681 = vmatprep.subr.mxu0 0.0
    %682 = vmatpush1.msra.mxu0 0.0
    %683 = vmatprep.subr.mxu0 0.0
    %684 = vmatpush1.msra.mxu0 0.0
    %685 = vmatprep.mubr.f32.mxu0 0.0
    %686 = vmatmul.mubr.f32.gmra.mrb[0].mxu0 %v67
    %v687 = vpop.f32.mrb[0].mxu0
    %v688 = vadd.f32 0.0, %v687
    %v689 = vpop.f32.mrb[0].mxu0
    %v690 = vadd.f32 0.0, %v689
    %691 = vdwg.mxu0
    %v692 = vmax.f32 %v481, %v617
    %v693 = vmax.f32 %v482, %v619
    %v694 = vmax.f32 %v483, %v688
    %v695 = vmax.f32 %v484, %v690
    %s696 = scalar_lea.vmem [#allocation2], 1536
    %v697 = vld [vmem:[%s696] sm:$0xff]
    %v698 = vld [vmem:[%s696 + $0x8] sm:$0xff]
    %v699 = vld [vmem:[%s696 + $0x10] sm:$0xff]
    %v700 = vld [vmem:[%s696 + $0x18] sm:$0xff]
    %v701 = vld [vmem:[%s696 + $0x20] sm:$0xff]
    %v702 = vld [vmem:[%s696 + $0x28] sm:$0xff]
    %v703 = vld [vmem:[%s696 + $0x30] sm:$0xff]
    %v704 = vld [vmem:[%s696 + $0x38] sm:$0xff]
    %v705 = vld [vmem:[%s696 + $0x40] sm:$0xff]
    %v706 = vld [vmem:[%s696 + $0x48] sm:$0xff]
    %v707 = vld [vmem:[%s696 + $0x50] sm:$0xff]
    %v708 = vld [vmem:[%s696 + $0x58] sm:$0xff]
    %v709 = vld [vmem:[%s696 + $0x60] sm:$0xff]
    %v710 = vld [vmem:[%s696 + $0x68] sm:$0xff]
    %v711 = vld [vmem:[%s696 + $0x70] sm:$0xff]
    %v712 = vld [vmem:[%s696 + $0x78] sm:$0xff]
    %v713 = vld [vmem:[%s696 + $0x80] sm:$0xff]
    %v714 = vld [vmem:[%s696 + $0x88] sm:$0xff]
    %v715 = vld [vmem:[%s696 + $0x90] sm:$0xff]
    %v716 = vld [vmem:[%s696 + $0x98] sm:$0xff]
    %v717 = vld [vmem:[%s696 + $0xa0] sm:$0xff]
    %v718 = vld [vmem:[%s696 + $0xa8] sm:$0xff]
    %v719 = vld [vmem:[%s696 + $0xb0] sm:$0xff]
    %v720 = vld [vmem:[%s696 + $0xb8] sm:$0xff]
    %v721 = vld [vmem:[%s696 + $0xc0] sm:$0xff]
    %v722 = vld [vmem:[%s696 + $0xc8] sm:$0xff]
    %v723 = vld [vmem:[%s696 + $0xd0] sm:$0xff]
    %v724 = vld [vmem:[%s696 + $0xd8] sm:$0xff]
    %v725 = vld [vmem:[%s696 + $0xe0] sm:$0xff]
    %v726 = vld [vmem:[%s696 + $0xe8] sm:$0xff]
    %v727 = vld [vmem:[%s696 + $0xf0] sm:$0xff]
    %v728 = vld [vmem:[%s696 + $0xf8] sm:$0xff]
    %v729 = vld [vmem:[%s696 + $0x100] sm:$0xff]
    %v730 = vld [vmem:[%s696 + $0x108] sm:$0xff]
    %v731 = vld [vmem:[%s696 + $0x110] sm:$0xff]
    %v732 = vld [vmem:[%s696 + $0x118] sm:$0xff]
    %v733 = vld [vmem:[%s696 + $0x120] sm:$0xff]
    %v734 = vld [vmem:[%s696 + $0x128] sm:$0xff]
    %v735 = vld [vmem:[%s696 + $0x130] sm:$0xff]
    %v736 = vld [vmem:[%s696 + $0x138] sm:$0xff]
    %v737 = vld [vmem:[%s696 + $0x140] sm:$0xff]
    %v738 = vld [vmem:[%s696 + $0x148] sm:$0xff]
    %v739 = vld [vmem:[%s696 + $0x150] sm:$0xff]
    %v740 = vld [vmem:[%s696 + $0x158] sm:$0xff]
    %v741 = vld [vmem:[%s696 + $0x160] sm:$0xff]
    %v742 = vld [vmem:[%s696 + $0x168] sm:$0xff]
    %v743 = vld [vmem:[%s696 + $0x170] sm:$0xff]
    %v744 = vld [vmem:[%s696 + $0x178] sm:$0xff]
    %v745 = vld [vmem:[%s696 + $0x180] sm:$0xff]
    %v746 = vld [vmem:[%s696 + $0x188] sm:$0xff]
    %v747 = vld [vmem:[%s696 + $0x190] sm:$0xff]
    %v748 = vld [vmem:[%s696 + $0x198] sm:$0xff]
    %v749 = vld [vmem:[%s696 + $0x1a0] sm:$0xff]
    %v750 = vld [vmem:[%s696 + $0x1a8] sm:$0xff]
    %v751 = vld [vmem:[%s696 + $0x1b0] sm:$0xff]
    %v752 = vld [vmem:[%s696 + $0x1b8] sm:$0xff]
    %v753 = vld [vmem:[%s696 + $0x1c0] sm:$0xff]
    %v754 = vld [vmem:[%s696 + $0x1c8] sm:$0xff]
    %v755 = vld [vmem:[%s696 + $0x1d0] sm:$0xff]
    %v756 = vld [vmem:[%s696 + $0x1d8] sm:$0xff]
    %v757 = vld [vmem:[%s696 + $0x1e0] sm:$0xff]
    %v758 = vld [vmem:[%s696 + $0x1e8] sm:$0xff]
    %v759 = vld [vmem:[%s696 + $0x1f0] sm:$0xff]
    %v760 = vld [vmem:[%s696 + $0x1f8] sm:$0xff]
    %761 = vmatprep.subr.mxu0 %v698
    %762 = vmatpush1.msra.mxu0 %v697
    %763 = vmatprep.subr.mxu0 %v702
    %764 = vmatpush1.msra.mxu0 %v701
    %765 = vmatprep.subr.mxu0 %v706
    %766 = vmatpush1.msra.mxu0 %v705
    %767 = vmatprep.subr.mxu0 %v710
    %768 = vmatpush1.msra.mxu0 %v709
    %769 = vmatprep.subr.mxu0 %v714
    %770 = vmatpush1.msra.mxu0 %v713
    %771 = vmatprep.subr.mxu0 %v718
    %772 = vmatpush1.msra.mxu0 %v717
    %773 = vmatprep.subr.mxu0 %v722
    %774 = vmatpush1.msra.mxu0 %v721
    %775 = vmatprep.subr.mxu0 %v726
    %776 = vmatpush1.msra.mxu0 %v725
    %777 = vmatprep.subr.mxu0 %v730
    %778 = vmatpush1.msra.mxu0 %v729
    %779 = vmatprep.subr.mxu0 %v734
    %780 = vmatpush1.msra.mxu0 %v733
    %781 = vmatprep.subr.mxu0 %v738
    %782 = vmatpush1.msra.mxu0 %v737
    %783 = vmatprep.subr.mxu0 %v742
    %784 = vmatpush1.msra.mxu0 %v741
    %785 = vmatprep.subr.mxu0 %v746
    %786 = vmatpush1.msra.mxu0 %v745
    %787 = vmatprep.subr.mxu0 %v750
    %788 = vmatpush1.msra.mxu0 %v749
    %789 = vmatprep.subr.mxu0 %v754
    %790 = vmatpush1.msra.mxu0 %v753
    %791 = vmatprep.subr.mxu0 %v758
    %792 = vmatpush1.msra.mxu0 %v757
    %793 = vmatprep.subr.mxu0 0.0
    %794 = vmatpush1.msra.mxu0 0.0
    %795 = vmatprep.subr.mxu0 0.0
    %796 = vmatpush1.msra.mxu0 0.0
    %797 = vmatprep.subr.mxu0 0.0
    %798 = vmatpush1.msra.mxu0 0.0
    %799 = vmatprep.subr.mxu0 0.0
    %800 = vmatpush1.msra.mxu0 0.0
    %801 = vmatprep.subr.mxu0 0.0
    %802 = vmatpush1.msra.mxu0 0.0
    %803 = vmatprep.subr.mxu0 0.0
    %804 = vmatpush1.msra.mxu0 0.0
    %805 = vmatprep.subr.mxu0 0.0
    %806 = vmatpush1.msra.mxu0 0.0
    %807 = vmatprep.subr.mxu0 0.0
    %808 = vmatpush1.msra.mxu0 0.0
    %809 = vmatprep.subr.mxu0 0.0
    %810 = vmatpush1.msra.mxu0 0.0
    %811 = vmatprep.subr.mxu0 0.0
    %812 = vmatpush1.msra.mxu0 0.0
    %813 = vmatprep.subr.mxu0 0.0
    %814 = vmatpush1.msra.mxu0 0.0
    %815 = vmatprep.subr.mxu0 0.0
    %816 = vmatpush1.msra.mxu0 0.0
    %817 = vmatprep.subr.mxu0 0.0
    %818 = vmatpush1.msra.mxu0 0.0
    %819 = vmatprep.subr.mxu0 0.0
    %820 = vmatpush1.msra.mxu0 0.0
    %821 = vmatprep.subr.mxu0 0.0
    %822 = vmatpush1.msra.mxu0 0.0
    %823 = vmatprep.subr.mxu0 0.0
    %824 = vmatpush1.msra.mxu0 0.0
    %825 = vmatprep.mubr.f32.mxu0 0.0
    %826 = vmatmul.mubr.f32.gmra.mrb[0].mxu0 %v67
    %v827 = vpop.f32.mrb[0].mxu0
    %v828 = vadd.f32 0.0, %v827
    %v829 = vpop.f32.mrb[0].mxu0
    %v830 = vadd.f32 0.0, %v829
    %831 = vdwg.mxu0
    %832 = vmatprep.subr.mxu0 %v700
    %833 = vmatpush1.msra.mxu0 %v699
    %834 = vmatprep.subr.mxu0 %v704
    %835 = vmatpush1.msra.mxu0 %v703
    %836 = vmatprep.subr.mxu0 %v708
    %837 = vmatpush1.msra.mxu0 %v707
    %838 = vmatprep.subr.mxu0 %v712
    %839 = vmatpush1.msra.mxu0 %v711
    %840 = vmatprep.subr.mxu0 %v716
    %841 = vmatpush1.msra.mxu0 %v715
    %842 = vmatprep.subr.mxu0 %v720
    %843 = vmatpush1.msra.mxu0 %v719
    %844 = vmatprep.subr.mxu0 %v724
    %845 = vmatpush1.msra.mxu0 %v723
    %846 = vmatprep.subr.mxu0 %v728
    %847 = vmatpush1.msra.mxu0 %v727
    %848 = vmatprep.subr.mxu0 %v732
    %849 = vmatpush1.msra.mxu0 %v731
    %850 = vmatprep.subr.mxu0 %v736
    %851 = vmatpush1.msra.mxu0 %v735
    %852 = vmatprep.subr.mxu0 %v740
    %853 = vmatpush1.msra.mxu0 %v739
    %854 = vmatprep.subr.mxu0 %v744
    %855 = vmatpush1.msra.mxu0 %v743
    %856 = vmatprep.subr.mxu0 %v748
    %857 = vmatpush1.msra.mxu0 %v747
    %858 = vmatprep.subr.mxu0 %v752
    %859 = vmatpush1.msra.mxu0 %v751
    %860 = vmatprep.subr.mxu0 %v756
    %861 = vmatpush1.msra.mxu0 %v755
    %862 = vmatprep.subr.mxu0 %v760
    %863 = vmatpush1.msra.mxu0 %v759
    %864 = vmatprep.subr.mxu0 0.0
    %865 = vmatpush1.msra.mxu0 0.0
    %866 = vmatprep.subr.mxu0 0.0
    %867 = vmatpush1.msra.mxu0 0.0
    %868 = vmatprep.subr.mxu0 0.0
    %869 = vmatpush1.msra.mxu0 0.0
    %870 = vmatprep.subr.mxu0 0.0
    %871 = vmatpush1.msra.mxu0 0.0
    %872 = vmatprep.subr.mxu0 0.0
    %873 = vmatpush1.msra.mxu0 0.0
    %874 = vmatprep.subr.mxu0 0.0
    %875 = vmatpush1.msra.mxu0 0.0
    %876 = vmatprep.subr.mxu0 0.0
    %877 = vmatpush1.msra.mxu0 0.0
    %878 = vmatprep.subr.mxu0 0.0
    %879 = vmatpush1.msra.mxu0 0.0
    %880 = vmatprep.subr.mxu0 0.0
    %881 = vmatpush1.msra.mxu0 0.0
    %882 = vmatprep.subr.mxu0 0.0
    %883 = vmatpush1.msra.mxu0 0.0
    %884 = vmatprep.subr.mxu0 0.0
    %885 = vmatpush1.msra.mxu0 0.0
    %886 = vmatprep.subr.mxu0 0.0
    %887 = vmatpush1.msra.mxu0 0.0
    %888 = vmatprep.subr.mxu0 0.0
    %889 = vmatpush1.msra.mxu0 0.0
    %890 = vmatprep.subr.mxu0 0.0
    %891 = vmatpush1.msra.mxu0 0.0
    %892 = vmatprep.subr.mxu0 0.0
    %893 = vmatpush1.msra.mxu0 0.0
    %894 = vmatprep.subr.mxu0 0.0
    %895 = vmatpush1.msra.mxu0 0.0
    %896 = vmatprep.mubr.f32.mxu0 0.0
    %897 = vmatmul.mubr.f32.gmra.mrb[0].mxu0 %v67
    %v898 = vpop.f32.mrb[0].mxu0
    %v899 = vadd.f32 0.0, %v898
    %v900 = vpop.f32.mrb[0].mxu0
    %v901 = vadd.f32 0.0, %v900
    %902 = vdwg.mxu0
    %v903 = vmax.f32 %v692, %v828
    %v904 = vmax.f32 %v693, %v830
    %v905 = vmax.f32 %v694, %v899
    %v906 = vmax.f32 %v695, %v901
    %v907 = vld [vmem:[%s2] sm:$0xf]
    %v909 = vlaneseq
    %v910 = vshrl.u32 %v909, 7
    %v911 = vsub.s32 0, %v910
    %v912 = vrot.slane %v907, %v911
    %v913 = vlaneseq
    %v914 = vshrl.u32 %v913, 7
    %v915 = vsub.s32 1, %v914
    %v916 = vrot.slane %v907, %v915
    %v917 = vlaneseq
    %v918 = vshrl.u32 %v917, 7
    %v919 = vsub.s32 2, %v918
    %v920 = vrot.slane %v907, %v919
    %v921 = vlaneseq
    %v922 = vshrl.u32 %v921, 7
    %v923 = vsub.s32 3, %v922
    %v924 = vrot.slane %v907, %v923
    %v929 = vadd.f32 %v903, %v912
    %v930 = vadd.f32 %v904, %v916
    %v931 = vadd.f32 %v905, %v920
    %v932 = vadd.f32 %v906, %v924
    %v933 = vmax.f32 %v929, 0.0
    %v934 = vmax.f32 %v930, 0.0
    %v935 = vmax.f32 %v931, 0.0
    %v936 = vmax.f32 %v932, 0.0
    %v937 = vld [vmem:[#allocation4] sm:$0xff]
    %v938 = vld [vmem:[#allocation4 + $0x8] sm:$0xff]
    %v939 = vld [vmem:[#allocation4 + $0x10] sm:$0xff]
    %v940 = vld [vmem:[#allocation4 + $0x18] sm:$0xff]
    %v941 = vld [vmem:[#allocation4 + $0x20] sm:$0xff]
    %v942 = vld [vmem:[#allocation4 + $0x28] sm:$0xff]
    %v943 = vld [vmem:[#allocation4 + $0x30] sm:$0xff]
    %v944 = vld [vmem:[#allocation4 + $0x38] sm:$0xff]
    %v945 = vld [vmem:[#allocation4 + $0x40] sm:$0xff]
    %v946 = vld [vmem:[#allocation4 + $0x48] sm:$0xff]
    %v947 = vld [vmem:[#allocation4 + $0x50] sm:$0xff]
    %v948 = vld [vmem:[#allocation4 + $0x58] sm:$0xff]
    %v949 = vld [vmem:[#allocation4 + $0x60] sm:$0xff]
    %v950 = vld [vmem:[#allocation4 + $0x68] sm:$0xff]
    %v951 = vld [vmem:[#allocation4 + $0x70] sm:$0xff]
    %v952 = vld [vmem:[#allocation4 + $0x78] sm:$0xff]
    %v953 = vld [vmem:[#allocation4 + $0x80] sm:$0xff]
    %v954 = vld [vmem:[#allocation4 + $0x88] sm:$0xff]
    %v955 = vld [vmem:[#allocation4 + $0x90] sm:$0xff]
    %v956 = vld [vmem:[#allocation4 + $0x98] sm:$0xff]
    %v957 = vld [vmem:[#allocation4 + $0xa0] sm:$0xff]
    %v958 = vld [vmem:[#allocation4 + $0xa8] sm:$0xff]
    %v959 = vld [vmem:[#allocation4 + $0xb0] sm:$0xff]
    %v960 = vld [vmem:[#allocation4 + $0xb8] sm:$0xff]
    %v961 = vld [vmem:[#allocation4 + $0xc0] sm:$0xff]
    %v962 = vld [vmem:[#allocation4 + $0xc8] sm:$0xff]
    %v963 = vld [vmem:[#allocation4 + $0xd0] sm:$0xff]
    %v964 = vld [vmem:[#allocation4 + $0xd8] sm:$0xff]
    %v965 = vld [vmem:[#allocation4 + $0xe0] sm:$0xff]
    %v966 = vld [vmem:[#allocation4 + $0xe8] sm:$0xff]
    %v967 = vld [vmem:[#allocation4 + $0xf0] sm:$0xff]
    %v968 = vld [vmem:[#allocation4 + $0xf8] sm:$0xff]
    %v969 = vld [vmem:[#allocation4 + $0x100] sm:$0xff]
    %v970 = vld [vmem:[#allocation4 + $0x108] sm:$0xff]
    %v971 = vld [vmem:[#allocation4 + $0x110] sm:$0xff]
    %v972 = vld [vmem:[#allocation4 + $0x118] sm:$0xff]
    %v973 = vld [vmem:[#allocation4 + $0x120] sm:$0xff]
    %v974 = vld [vmem:[#allocation4 + $0x128] sm:$0xff]
    %v975 = vld [vmem:[#allocation4 + $0x130] sm:$0xff]
    %v976 = vld [vmem:[#allocation4 + $0x138] sm:$0xff]
    %v977 = vld [vmem:[#allocation4 + $0x140] sm:$0xff]
    %v978 = vld [vmem:[#allocation4 + $0x148] sm:$0xff]
    %v979 = vld [vmem:[#allocation4 + $0x150] sm:$0xff]
    %v980 = vld [vmem:[#allocation4 + $0x158] sm:$0xff]
    %v981 = vld [vmem:[#allocation4 + $0x160] sm:$0xff]
    %v982 = vld [vmem:[#allocation4 + $0x168] sm:$0xff]
    %v983 = vld [vmem:[#allocation4 + $0x170] sm:$0xff]
    %v984 = vld [vmem:[#allocation4 + $0x178] sm:$0xff]
    %v985 = vld [vmem:[#allocation4 + $0x180] sm:$0xff]
    %v986 = vld [vmem:[#allocation4 + $0x188] sm:$0xff]
    %v987 = vld [vmem:[#allocation4 + $0x190] sm:$0xff]
    %v988 = vld [vmem:[#allocation4 + $0x198] sm:$0xff]
    %v989 = vld [vmem:[#allocation4 + $0x1a0] sm:$0xff]
    %v990 = vld [vmem:[#allocation4 + $0x1a8] sm:$0xff]
    %v991 = vld [vmem:[#allocation4 + $0x1b0] sm:$0xff]
    %v992 = vld [vmem:[#allocation4 + $0x1b8] sm:$0xff]
    %v993 = vld [vmem:[#allocation4 + $0x1c0] sm:$0xff]
    %v994 = vld [vmem:[#allocation4 + $0x1c8] sm:$0xff]
    %v995 = vld [vmem:[#allocation4 + $0x1d0] sm:$0xff]
    %v996 = vld [vmem:[#allocation4 + $0x1d8] sm:$0xff]
    %v997 = vld [vmem:[#allocation4 + $0x1e0] sm:$0xff]
    %v998 = vld [vmem:[#allocation4 + $0x1e8] sm:$0xff]
    %v999 = vld [vmem:[#allocation4 + $0x1f0] sm:$0xff]
    %v1000 = vld [vmem:[#allocation4 + $0x1f8] sm:$0xff]
    %v1001 = vld [vmem:[%s4] sm:$0x1]
    %v1003 = vlaneseq
    %v1004 = vshrl.u32 %v1003, 7
    %v1005 = vsub.s32 0, %v1004
    %v1006 = vrot.slane %v1001, %v1005
    %1008 = vmatprep.subr.mxu0 0.0
    %1009 = vmatpush1.msra.mxu0 %v937
    %1010 = vmatprep.subr.mxu0 0.0
    %1011 = vmatpush1.msra.mxu0 %v938
    %1012 = vmatprep.subr.mxu0 0.0
    %1013 = vmatpush1.msra.mxu0 %v939
    %1014 = vmatprep.subr.mxu0 0.0
    %1015 = vmatpush1.msra.mxu0 %v940
    %1016 = vmatprep.subr.mxu0 0.0
    %1017 = vmatpush1.msra.mxu0 %v941
    %1018 = vmatprep.subr.mxu0 0.0
    %1019 = vmatpush1.msra.mxu0 %v942
    %1020 = vmatprep.subr.mxu0 0.0
    %1021 = vmatpush1.msra.mxu0 %v943
    %1022 = vmatprep.subr.mxu0 0.0
    %1023 = vmatpush1.msra.mxu0 %v944
    %1024 = vmatprep.subr.mxu0 0.0
    %1025 = vmatpush1.msra.mxu0 %v945
    %1026 = vmatprep.subr.mxu0 0.0
    %1027 = vmatpush1.msra.mxu0 %v946
    %1028 = vmatprep.subr.mxu0 0.0
    %1029 = vmatpush1.msra.mxu0 %v947
    %1030 = vmatprep.subr.mxu0 0.0
    %1031 = vmatpush1.msra.mxu0 %v948
    %1032 = vmatprep.subr.mxu0 0.0
    %1033 = vmatpush1.msra.mxu0 %v949
    %1034 = vmatprep.subr.mxu0 0.0
    %1035 = vmatpush1.msra.mxu0 %v950
    %1036 = vmatprep.subr.mxu0 0.0
    %1037 = vmatpush1.msra.mxu0 %v951
    %1038 = vmatprep.subr.mxu0 0.0
    %1039 = vmatpush1.msra.mxu0 %v952
    %1040 = vmatprep.subr.mxu0 0.0
    %1041 = vmatpush1.msra.mxu0 %v953
    %1042 = vmatprep.subr.mxu0 0.0
    %1043 = vmatpush1.msra.mxu0 %v954
    %1044 = vmatprep.subr.mxu0 0.0
    %1045 = vmatpush1.msra.mxu0 %v955
    %1046 = vmatprep.subr.mxu0 0.0
    %1047 = vmatpush1.msra.mxu0 %v956
    %1048 = vmatprep.subr.mxu0 0.0
    %1049 = vmatpush1.msra.mxu0 %v957
    %1050 = vmatprep.subr.mxu0 0.0
    %1051 = vmatpush1.msra.mxu0 %v958
    %1052 = vmatprep.subr.mxu0 0.0
    %1053 = vmatpush1.msra.mxu0 %v959
    %1054 = vmatprep.subr.mxu0 0.0
    %1055 = vmatpush1.msra.mxu0 %v960
    %1056 = vmatprep.subr.mxu0 0.0
    %1057 = vmatpush1.msra.mxu0 %v961
    %1058 = vmatprep.subr.mxu0 0.0
    %1059 = vmatpush1.msra.mxu0 %v962
    %1060 = vmatprep.subr.mxu0 0.0
    %1061 = vmatpush1.msra.mxu0 %v963
    %1062 = vmatprep.subr.mxu0 0.0
    %1063 = vmatpush1.msra.mxu0 %v964
    %1064 = vmatprep.subr.mxu0 0.0
    %1065 = vmatpush1.msra.mxu0 %v965
    %1066 = vmatprep.subr.mxu0 0.0
    %1067 = vmatpush1.msra.mxu0 %v966
    %1068 = vmatprep.subr.mxu0 0.0
    %1069 = vmatpush1.msra.mxu0 %v967
    %1070 = vmatprep.subr.mxu0 0.0
    %1071 = vmatpush1.msra.mxu0 %v968
    %1072 = vmatprep.mubr.f32.mxu0 %v934
    %1073 = vmatmul.mubr.f32.gmra.mrb[0].mxu0 %v933
    %v1074 = vpop.f32.mrb[0].mxu0
    %v1075 = vadd.f32 %v1006, %v1074
    %v1076 = vpop.f32.mrb[0].mxu0
    %1077 = vdwg.mxu0
    %1078 = vmatprep.subr.mxu0 0.0
    %1079 = vmatpush1.msra.mxu0 %v969
    %1080 = vmatprep.subr.mxu0 0.0
    %1081 = vmatpush1.msra.mxu0 %v970
    %1082 = vmatprep.subr.mxu0 0.0
    %1083 = vmatpush1.msra.mxu0 %v971
    %1084 = vmatprep.subr.mxu0 0.0
    %1085 = vmatpush1.msra.mxu0 %v972
    %1086 = vmatprep.subr.mxu0 0.0
    %1087 = vmatpush1.msra.mxu0 %v973
    %1088 = vmatprep.subr.mxu0 0.0
    %1089 = vmatpush1.msra.mxu0 %v974
    %1090 = vmatprep.subr.mxu0 0.0
    %1091 = vmatpush1.msra.mxu0 %v975
    %1092 = vmatprep.subr.mxu0 0.0
    %1093 = vmatpush1.msra.mxu0 %v976
    %1094 = vmatprep.subr.mxu0 0.0
    %1095 = vmatpush1.msra.mxu0 %v977
    %1096 = vmatprep.subr.mxu0 0.0
    %1097 = vmatpush1.msra.mxu0 %v978
    %1098 = vmatprep.subr.mxu0 0.0
    %1099 = vmatpush1.msra.mxu0 %v979
    %1100 = vmatprep.subr.mxu0 0.0
    %1101 = vmatpush1.msra.mxu0 %v980
    %1102 = vmatprep.subr.mxu0 0.0
    %1103 = vmatpush1.msra.mxu0 %v981
    %1104 = vmatprep.subr.mxu0 0.0
    %1105 = vmatpush1.msra.mxu0 %v982
    %1106 = vmatprep.subr.mxu0 0.0
    %1107 = vmatpush1.msra.mxu0 %v983
    %1108 = vmatprep.subr.mxu0 0.0
    %1109 = vmatpush1.msra.mxu0 %v984
    %1110 = vmatprep.subr.mxu0 0.0
    %1111 = vmatpush1.msra.mxu0 %v985
    %1112 = vmatprep.subr.mxu0 0.0
    %1113 = vmatpush1.msra.mxu0 %v986
    %1114 = vmatprep.subr.mxu0 0.0
    %1115 = vmatpush1.msra.mxu0 %v987
    %1116 = vmatprep.subr.mxu0 0.0
    %1117 = vmatpush1.msra.mxu0 %v988
    %1118 = vmatprep.subr.mxu0 0.0
    %1119 = vmatpush1.msra.mxu0 %v989
    %1120 = vmatprep.subr.mxu0 0.0
    %1121 = vmatpush1.msra.mxu0 %v990
    %1122 = vmatprep.subr.mxu0 0.0
    %1123 = vmatpush1.msra.mxu0 %v991
    %1124 = vmatprep.subr.mxu0 0.0
    %1125 = vmatpush1.msra.mxu0 %v992
    %1126 = vmatprep.subr.mxu0 0.0
    %1127 = vmatpush1.msra.mxu0 %v993
    %1128 = vmatprep.subr.mxu0 0.0
    %1129 = vmatpush1.msra.mxu0 %v994
    %1130 = vmatprep.subr.mxu0 0.0
    %1131 = vmatpush1.msra.mxu0 %v995
    %1132 = vmatprep.subr.mxu0 0.0
    %1133 = vmatpush1.msra.mxu0 %v996
    %1134 = vmatprep.subr.mxu0 0.0
    %1135 = vmatpush1.msra.mxu0 %v997
    %1136 = vmatprep.subr.mxu0 0.0
    %1137 = vmatpush1.msra.mxu0 %v998
    %1138 = vmatprep.subr.mxu0 0.0
    %1139 = vmatpush1.msra.mxu0 %v999
    %1140 = vmatprep.subr.mxu0 0.0
    %1141 = vmatpush1.msra.mxu0 %v1000
    %1142 = vmatprep.mubr.f32.mxu0 %v936
    %1143 = vmatmul.mubr.f32.gmra.mrb[0].mxu0 %v935
    %v1144 = vpop.f32.mrb[0].mxu0
    %v1145 = vadd.f32 %v1075, %v1144
    %v1146 = vpop.f32.mrb[0].mxu0
    %1147 = vdwg.mxu0
    %v1148 = vmax.f32 %v1145, 0.0
    %v1149 = vld [vmem:[#allocation6] sm:$0xff]
    %v1150 = vld [vmem:[#allocation6 + $0x8] sm:$0xff]
    %v1151 = vld [vmem:[#allocation6 + $0x10] sm:$0xff]
    %v1152 = vld [vmem:[#allocation6 + $0x18] sm:$0xff]
    %v1153 = vld [vmem:[#allocation6 + $0x20] sm:$0xff]
    %v1154 = vld [vmem:[#allocation6 + $0x28] sm:$0xff]
    %v1155 = vld [vmem:[#allocation6 + $0x30] sm:$0xff]
    %v1156 = vld [vmem:[#allocation6 + $0x38] sm:$0xff]
    %v1157 = vld [vmem:[#allocation6 + $0x40] sm:$0xff]
    %v1158 = vld [vmem:[#allocation6 + $0x48] sm:$0xff]
    %v1159 = vld [vmem:[#allocation6 + $0x50] sm:$0xff]
    %v1160 = vld [vmem:[#allocation6 + $0x58] sm:$0xff]
    %v1161 = vld [vmem:[#allocation6 + $0x60] sm:$0xff]
    %v1162 = vld [vmem:[#allocation6 + $0x68] sm:$0xff]
    %v1163 = vld [vmem:[#allocation6 + $0x70] sm:$0xff]
    %v1164 = vld [vmem:[#allocation6 + $0x78] sm:$0xff]
    %v1165 = vld [vmem:[%s6] sm:$0x1]
    %v1167 = vlaneseq
    %v1168 = vshrl.u32 %v1167, 7
    %v1169 = vsub.s32 0, %v1168
    %v1170 = vrot.slane %v1165, %v1169
    %1172 = vmatprep.subr.mxu0 0.0
    %1173 = vmatpush1.msra.mxu0 %v1149
    %1174 = vmatprep.subr.mxu0 0.0
    %1175 = vmatpush1.msra.mxu0 %v1150
    %1176 = vmatprep.subr.mxu0 0.0
    %1177 = vmatpush1.msra.mxu0 %v1151
    %1178 = vmatprep.subr.mxu0 0.0
    %1179 = vmatpush1.msra.mxu0 %v1152
    %1180 = vmatprep.subr.mxu0 0.0
    %1181 = vmatpush1.msra.mxu0 %v1153
    %1182 = vmatprep.subr.mxu0 0.0
    %1183 = vmatpush1.msra.mxu0 %v1154
    %1184 = vmatprep.subr.mxu0 0.0
    %1185 = vmatpush1.msra.mxu0 %v1155
    %1186 = vmatprep.subr.mxu0 0.0
    %1187 = vmatpush1.msra.mxu0 %v1156
    %1188 = vmatprep.subr.mxu0 0.0
    %1189 = vmatpush1.msra.mxu0 %v1157
    %1190 = vmatprep.subr.mxu0 0.0
    %1191 = vmatpush1.msra.mxu0 %v1158
    %1192 = vmatprep.subr.mxu0 0.0
    %1193 = vmatpush1.msra.mxu0 %v1159
    %1194 = vmatprep.subr.mxu0 0.0
    %1195 = vmatpush1.msra.mxu0 %v1160
    %1196 = vmatprep.subr.mxu0 0.0
    %1197 = vmatpush1.msra.mxu0 %v1161
    %1198 = vmatprep.subr.mxu0 0.0
    %1199 = vmatpush1.msra.mxu0 %v1162
    %1200 = vmatprep.subr.mxu0 0.0
    %1201 = vmatpush1.msra.mxu0 %v1163
    %1202 = vmatprep.subr.mxu0 0.0
    %1203 = vmatpush1.msra.mxu0 %v1164
    %1204 = vmatprep.subr.mxu0 0.0
    %1205 = vmatpush1.msra.mxu0 0.0
    %1206 = vmatprep.subr.mxu0 0.0
    %1207 = vmatpush1.msra.mxu0 0.0
    %1208 = vmatprep.subr.mxu0 0.0
    %1209 = vmatpush1.msra.mxu0 0.0
    %1210 = vmatprep.subr.mxu0 0.0
    %1211 = vmatpush1.msra.mxu0 0.0
    %1212 = vmatprep.subr.mxu0 0.0
    %1213 = vmatpush1.msra.mxu0 0.0
    %1214 = vmatprep.subr.mxu0 0.0
    %1215 = vmatpush1.msra.mxu0 0.0
    %1216 = vmatprep.subr.mxu0 0.0
    %1217 = vmatpush1.msra.mxu0 0.0
    %1218 = vmatprep.subr.mxu0 0.0
    %1219 = vmatpush1.msra.mxu0 0.0
    %1220 = vmatprep.subr.mxu0 0.0
    %1221 = vmatpush1.msra.mxu0 0.0
    %1222 = vmatprep.subr.mxu0 0.0
    %1223 = vmatpush1.msra.mxu0 0.0
    %1224 = vmatprep.subr.mxu0 0.0
    %1225 = vmatpush1.msra.mxu0 0.0
    %1226 = vmatprep.subr.mxu0 0.0
    %1227 = vmatpush1.msra.mxu0 0.0
    %1228 = vmatprep.subr.mxu0 0.0
    %1229 = vmatpush1.msra.mxu0 0.0
    %1230 = vmatprep.subr.mxu0 0.0
    %1231 = vmatpush1.msra.mxu0 0.0
    %1232 = vmatprep.subr.mxu0 0.0
    %1233 = vmatpush1.msra.mxu0 0.0
    %1234 = vmatprep.subr.mxu0 0.0
    %1235 = vmatpush1.msra.mxu0 0.0
    %1236 = vmatprep.mubr.f32.mxu0 0.0
    %1237 = vmatmul.mubr.f32.gmra.mrb[0].mxu0 %v1148
    %v1238 = vpop.f32.mrb[0].mxu0
    %v1239 = vadd.f32 %v1170, %v1238
    %v1240 = vpop.f32.mrb[0].mxu0
    %1241 = vdwg.mxu0
    %1242 = vst [vmem:[%s7] sm:$0xff] %v1239
    // Predicated region
    $region42: #{cnn_forward_prepared.1} parent=1 // pred_check
      _
    $region43: #{cnn_forward_prepared.1} parent=1 // pred_check_branch
      %1244 = sbr.rel (0) target = $region45
    $region44: #{cnn_forward_prepared.1} parent=1 // pred_region
      _
    $region45: #{cnn_forward_prepared.1} parent=1 // pred_fallthru
      _
    // Predicated region
    $region46: #{cnn_forward_prepared.1} parent=1 // pred_check
      _
    $region47: #{cnn_forward_prepared.1} parent=1 // pred_check_branch
      %1246 = sbr.rel (0) target = $region49
    $region48: #{cnn_forward_prepared.1} parent=1 // pred_region
      _
    $region49: #{cnn_forward_prepared.1} parent=1 // pred_fallthru
      _
    %1247 = vsyncpa [#allocation3], 1
    %1248 = vsyncpa [#allocation5], 1

</llo_original>
